<compile_context>
chip_gen: v5e
topology: v5e:2x2
jax: 0.10.0
libtpu: 0.0.40
codegen_flags: <defaults>
</compile_context>

<pallas_src>
import functools

import numpy as np

import jax
import jax.numpy as jnp
from jax.experimental import pallas as pl
from jax.experimental.pallas import tpu as pltpu


# -----------------------------------------------------------------------------
# Fused Pallas kernel
# -----------------------------------------------------------------------------
def _unet_up_fused_kernel(xs_ref, xp_ref, sel_ref, mask_ref,
                          wue_ref, wuo_ref, bup_ref,
                          w1_ref, g1_ref, be1_ref,
                          w2_ref, g2_ref, be2_ref,
                          out_ref, cat_ref, *,
                          B, L, Lskip, Cin, Cskip, Cout, eps):
    """Flat layout: each batch occupies Sb = Lskip + 8 rows: [4 zeros | Lskip data
    | 4 zeros].  cat_ref has 4 extra zero rows at each end so every im2col tap is
    a plain static slice.  All shapes/offsets are static Python ints."""
    Sb = Lskip + 8
    Nc = B * Sb
    Ccat = Cskip + Cin
    inv_cnt = 1.0 / float(B * Lskip)

    # -------------------------------------------------------------------------
    # 1. ConvTranspose1d (two phase convs, 4*Cin contraction each) + bias,
    #    interleave + F.pad via one selection matmul, channel-concat with the
    #    skip, assembled straight into the zero-padded flat VMEM buffer.
    # -------------------------------------------------------------------------
    cat_ref[...] = jnp.zeros_like(cat_ref)

    bup = bup_ref[...]          # (1, Cin)
    sel = sel_ref[...]          # (Lskip, 2L)
    wue = wue_ref[...]          # (4*Cin, Cin)  taps [W7, W5, W3, W1]
    wuo = wuo_ref[...]          # (4*Cin, Cin)  taps [W6, W4, W2, W0]
    for b in range(B):          # up-conv is tiny; main convs below fold B into M
        xb = xp_ref[b]          # (L + 4, Cin): x padded by 2 each side
        cols_e = jnp.concatenate([xb[j:j + L, :] for j in range(4)], axis=1)
        cols_o = jnp.concatenate([xb[1 + j:1 + j + L, :] for j in range(4)], axis=1)
        x_e = jnp.dot(cols_e, wue, preferred_element_type=jnp.float32) + bup
        x_o = jnp.dot(cols_o, wuo, preferred_element_type=jnp.float32) + bup
        # interleave even/odd phases and place at the F.pad offset in one matmul
        xup = jnp.dot(sel, jnp.concatenate([x_e, x_o], axis=0),
                      preferred_element_type=jnp.float32)        # (Lskip, Cin)
        r0 = b * Sb + 8         # 4 (outer margin) + 4 (per-block conv padding)
        cat_ref[r0:r0 + Lskip, :] = jnp.concatenate([xs_ref[b], xup], axis=1)

    mask = mask_ref[...]        # (Nc, 1): 1 on valid rows, 0 on padding rows

    # -------------------------------------------------------------------------
    # Conv1d(k=9, pad=4) + BatchNorm1d(train) + ReLU, all batches in one matmul.
    # -------------------------------------------------------------------------
    def conv_bn_relu(xpad, wflat, gamma, beta):
        # xpad: (Nc + 8, C)  ->  im2col (Nc, 9*C)  ->  one MXU matmul
        cols = jnp.concatenate([xpad[k:k + Nc, :] for k in range(9)], axis=1)
        y = jnp.dot(cols, wflat, preferred_element_type=jnp.float32)   # (Nc, Cout)
        # conv bias omitted: exactly cancelled by the BN mean subtraction.
        mean = jnp.sum(y * mask, axis=0, keepdims=True) * inv_cnt
        var = jnp.sum(mask * jnp.square(y - mean), axis=0, keepdims=True) * inv_cnt
        h = (y - mean) * jax.lax.rsqrt(var + eps) * gamma + beta
        # zero the padding rows so they act as the next conv's zero padding
        return jnp.maximum(h, 0.0) * mask

    # -------- stage 1 --------
    h1 = conv_bn_relu(cat_ref[...], w1_ref[...], g1_ref[...], be1_ref[...])

    # -------- stage 2 (stage-1 result never leaves VMEM/registers) --------
    z4 = jnp.zeros((4, Cout), jnp.float32)
    h1_pad = jnp.concatenate([z4, h1, z4], axis=0)          # (Nc + 8, Cout)
    h2 = conv_bn_relu(h1_pad, w2_ref[...], g2_ref[...], be2_ref[...])

    # single final store per batch (only write to out_ref in the whole kernel)
    for b in range(B):
        out_ref[b] = h2[b * Sb + 4:b * Sb + 4 + Lskip, :]


# -----------------------------------------------------------------------------
# Wrapper: layout plumbing (NCL <-> NLC, weight re-layout, constant tables)
# -----------------------------------------------------------------------------
def unet_up_forward(X_skip, X, params, eps=1e-5):
    """X_skip: (B, Cskip, Lskip) NCL;  X: (B, Cin, L) NCL -> (B, Cout, Lskip) NCL."""
    B, Cin, L = X.shape
    _, Cskip, Lskip = X_skip.shape
    Cout = params['w1'].shape[0]
    Ccat = Cin + Cskip

    Lup = 2 * L                      # ConvTranspose1d(k=8, s=2, p=3)
    diff = Lskip - Lup
    assert diff >= 0, "TODO(synk): negative diff (cropping F.pad) not handled"
    dl = diff // 2
    Sb = Lskip + 8
    Nc = B * Sb

    # NCL -> NLC (channels on lanes inside the kernel)
    x = jnp.transpose(X, (0, 2, 1))          # (B, L, Cin)
    xs = jnp.transpose(X_skip, (0, 2, 1))    # (B, Lskip, Cskip)
    # tiny halo pad (2 each side) for the 4-tap phase convs of the up-sampling
    xpad = jnp.pad(x, ((0, 0), (2, 2), (0, 0)))

    # ConvTranspose1d weight (Cin, Cout=Cin, 8): phase-split, taps stacked on the
    # contraction axis so each phase is a single (L, 4*Cin) @ (4*Cin, Cin) matmul.
    wup = params['w_up']
    w_e = jnp.concatenate([wup[:, :, k] for k in (7, 5, 3, 1)], axis=0)  # (4Cin, Cin)
    w_o = jnp.concatenate([wup[:, :, k] for k in (6, 4, 2, 0)], axis=0)
    b_up = params['b_up'].reshape(1, Cin)

    # Conv1d weights (Cout, Cin, 9) -> (9*Cin, Cout) for the im2col contraction.
    w1f = jnp.transpose(params['w1'], (2, 1, 0)).reshape(9 * Ccat, Cout)
    w2f = jnp.transpose(params['w2'], (2, 1, 0)).reshape(9 * Cout, Cout)
    # NOTE: conv biases b1/b2 are not passed to the kernel — they are cancelled
    # exactly by the training-mode BatchNorm mean subtraction.

    # constant selection matrix: interleave even/odd phases + F.pad placement
    sel_np = np.zeros((Lskip, 2 * L), np.float32)
    m = np.arange(L)
    sel_np[dl + 2 * m, m] = 1.0
    sel_np[dl + 2 * m + 1, L + m] = 1.0
    sel = jnp.asarray(sel_np)

    # validity mask for the flat per-batch-padded layout
    vm_np = np.zeros((Nc, 1), np.float32)
    for b in range(B):
        vm_np[b * Sb + 4:b * Sb + 4 + Lskip, 0] = 1.0
    vm = jnp.asarray(vm_np)

    kernel = functools.partial(
        _unet_up_fused_kernel, B=B, L=L, Lskip=Lskip,
        Cin=Cin, Cskip=Cskip, Cout=Cout, eps=eps)

    out_nlc = pl.pallas_call(
        kernel,
        out_shape=jax.ShapeDtypeStruct((B, Lskip, Cout), jnp.float32),
        in_specs=[pl.BlockSpec(memory_space=pltpu.MemorySpace.VMEM)] * 13,
        out_specs=pl.BlockSpec(memory_space=pltpu.MemorySpace.VMEM),
        scratch_shapes=[pltpu.VMEM((Nc + 8, Ccat), jnp.float32)],
        compiler_params=pltpu.CompilerParams(vmem_limit_bytes=32 * 1024 * 1024),
    )(xs, xpad, sel, vm, w_e, w_o, b_up,
      w1f, params['g1'].reshape(1, Cout), params['be1'].reshape(1, Cout),
      w2f, params['g2'].reshape(1, Cout), params['be2'].reshape(1, Cout))

    # NLC -> NCL
    return jnp.transpose(out_nlc, (0, 2, 1))


# -----------------------------------------------------------------------------
# Pure NumPy reference (PyTorch semantics, NCL layout)
# -----------------------------------------------------------------------------
def _ref_conv_transpose1d(x, W, bias, stride, pad):
    B, Ci, L = x.shape
    _, Co, K = W.shape
    Lout = (L - 1) * stride - 2 * pad + K
    out = np.zeros((B, Co, Lout), np.float64)
    for i in range(L):
        for k in range(K):
            t = i * stride - pad + k
            if 0 <= t < Lout:
                out[:, :, t] += x[:, :, i] @ W[:, :, k]
    return out + bias[None, :, None]


def _ref_conv1d(x, W, bias, pad):
    B, Ci, L = x.shape
    Co, _, K = W.shape
    xp = np.pad(x, ((0, 0), (0, 0), (pad, pad)))
    Lout = L + 2 * pad - K + 1
    out = np.zeros((B, Co, Lout), np.float64)
    for k in range(K):
        out += np.einsum('bcl,oc->bol', xp[:, :, k:k + Lout], W[:, :, k])
    return out + bias[None, :, None]


def _ref_bn_relu(x, gamma, beta, eps=1e-5):
    mean = x.mean(axis=(0, 2), keepdims=True)
    var = x.var(axis=(0, 2), keepdims=True)   # biased, as in torch training mode
    y = (x - mean) / np.sqrt(var + eps)
    y = y * gamma[None, :, None] + beta[None, :, None]
    return np.maximum(y, 0.0)


def _ref_unet_up(Xs, X, p):
    y = _ref_conv_transpose1d(X, p['w_up'], p['b_up'], 2, 3)
    diff = Xs.shape[2] - y.shape[2]
    y = np.pad(y, ((0, 0), (0, 0), (diff // 2, diff - diff // 2)))
    y = np.concatenate([Xs, y], axis=1)
    y = _ref_conv1d(y, p['w1'], p['b1'], 4)
    y = _ref_bn_relu(y, p['g1'], p['be1'])
    y = _ref_conv1d(y, p['w2'], p['b2'], 4)
    y = _ref_bn_relu(y, p['g2'], p['be2'])
    return y


# -----------------------------------------------------------------------------
if __name__ == "__main__":
    B = 2
    in_channels = 8        # Cin of X (and of the ConvTranspose1d)
    in_channels_skip = 8   # Cskip of X_skip
    out_channels = 8
    L = 8                  # length of X  -> upsampled to 2*L = 16
    Lskip = 16             # length of X_skip

    key = jax.random.PRNGKey(0)
    ks = jax.random.split(key, 12)

    X = jax.random.normal(ks[0], (B, in_channels, L), jnp.float32)
    X_skip = jax.random.normal(ks[1], (B, in_channels_skip, Lskip), jnp.float32)

    Ccat = in_channels + in_channels_skip
    params = {
        # ConvTranspose1d(in, in, k=8): weight (Cin, Cout=Cin, 8), bias (Cin,)
        'w_up': 0.1 * jax.random.normal(ks[2], (in_channels, in_channels, 8), jnp.float32),
        'b_up': 0.1 * jax.random.normal(ks[3], (in_channels,), jnp.float32),
        # Conv1d(Ccat, out, k=9)
        'w1': 0.1 * jax.random.normal(ks[4], (out_channels, Ccat, 9), jnp.float32),
        'b1': 0.1 * jax.random.normal(ks[5], (out_channels,), jnp.float32),
        'g1': 1.0 + 0.1 * jax.random.normal(ks[6], (out_channels,), jnp.float32),
        'be1': 0.1 * jax.random.normal(ks[7], (out_channels,), jnp.float32),
        # Conv1d(out, out, k=9)
        'w2': 0.1 * jax.random.normal(ks[8], (out_channels, out_channels, 9), jnp.float32),
        'b2': 0.1 * jax.random.normal(ks[9], (out_channels,), jnp.float32),
        'g2': 1.0 + 0.1 * jax.random.normal(ks[10], (out_channels,), jnp.float32),
        'be2': 0.1 * jax.random.normal(ks[11], (out_channels,), jnp.float32),
    }

    out = jax.jit(unet_up_forward)(X_skip, X, params)
    out = jax.block_until_ready(out)
    assert out.shape == (B, out_channels, Lskip), out.shape

    ref = _ref_unet_up(np.asarray(X_skip, np.float64), np.asarray(X, np.float64),
                       {k: np.asarray(v, np.float64) for k, v in params.items()})
    np.testing.assert_allclose(np.asarray(out, np.float64), ref, rtol=2e-3, atol=2e-3)

    print("KERNEL_OK")
</pallas_src>

<mosaic_0001>
module attributes {stable_mosaic.version = 11 : i64} {
  func.func @_unet_up_fused_kernel(%arg0: memref<2x16x8xf32, #tpu.memory_space<vmem>>, %arg1: memref<2x12x8xf32, #tpu.memory_space<vmem>>, %arg2: memref<16x16xf32, #tpu.memory_space<vmem>>, %arg3: memref<48x1xf32, #tpu.memory_space<vmem>>, %arg4: memref<32x8xf32, #tpu.memory_space<vmem>>, %arg5: memref<32x8xf32, #tpu.memory_space<vmem>>, %arg6: memref<1x8xf32, #tpu.memory_space<vmem>>, %arg7: memref<144x8xf32, #tpu.memory_space<vmem>>, %arg8: memref<1x8xf32, #tpu.memory_space<vmem>>, %arg9: memref<1x8xf32, #tpu.memory_space<vmem>>, %arg10: memref<72x8xf32, #tpu.memory_space<vmem>>, %arg11: memref<1x8xf32, #tpu.memory_space<vmem>>, %arg12: memref<1x8xf32, #tpu.memory_space<vmem>>, %arg13: memref<2x16x8xf32, #tpu.memory_space<vmem>>, %arg14: memref<56x16xf32, #tpu.memory_space<vmem>>) attributes {dimension_semantics = [], scalar_prefetch = 0 : i64, scratch_operands = 1 : i64, tpu.core_type = #tpu.core_type<tc>} {
    %cst = arith.constant 0.000000e+00 : f32
    %0 = vector.broadcast %cst : f32 to vector<56x16xf32>
    %c0 = arith.constant 0 : index
    %c0_0 = arith.constant 0 : index
    %1 = vector.load %arg14[%c0, %c0_0] : memref<56x16xf32, #tpu.memory_space<vmem>>, vector<56x16xf32>
    tpu.vector_store %arg14[%c0, %c0_0], %0 {strides = array<i32>} : memref<56x16xf32, #tpu.memory_space<vmem>>, vector<56x16xf32>,
    %c0_1 = arith.constant 0 : index
    %c0_2 = arith.constant 0 : index
    %2 = vector.load %arg6[%c0_1, %c0_2] : memref<1x8xf32, #tpu.memory_space<vmem>>, vector<1x8xf32>
    %c0_3 = arith.constant 0 : index
    %c0_4 = arith.constant 0 : index
    %3 = vector.load %arg2[%c0_3, %c0_4] : memref<16x16xf32, #tpu.memory_space<vmem>>, vector<16x16xf32>
    %c0_5 = arith.constant 0 : index
    %c0_6 = arith.constant 0 : index
    %4 = vector.load %arg4[%c0_5, %c0_6] : memref<32x8xf32, #tpu.memory_space<vmem>>, vector<32x8xf32>
    %c0_7 = arith.constant 0 : index
    %c0_8 = arith.constant 0 : index
    %5 = vector.load %arg5[%c0_7, %c0_8] : memref<32x8xf32, #tpu.memory_space<vmem>>, vector<32x8xf32>
    %c0_9 = arith.constant 0 : index
    %c0_10 = arith.constant 0 : index
    %c0_11 = arith.constant 0 : index
    %6 = vector.load %arg1[%c0_9, %c0_10, %c0_11] : memref<2x12x8xf32, #tpu.memory_space<vmem>>, vector<1x12x8xf32>
    %7 = vector.shape_cast %6 : vector<1x12x8xf32> to vector<12x8xf32>
    %8 = vector.extract_strided_slice %7 {offsets = [0, 0], sizes = [8, 8], strides = [1, 1]} : vector<12x8xf32> to vector<8x8xf32>
    %9 = vector.extract_strided_slice %7 {offsets = [1, 0], sizes = [8, 8], strides = [1, 1]} : vector<12x8xf32> to vector<8x8xf32>
    %10 = vector.extract_strided_slice %7 {offsets = [2, 0], sizes = [8, 8], strides = [1, 1]} : vector<12x8xf32> to vector<8x8xf32>
    %11 = vector.extract_strided_slice %7 {offsets = [3, 0], sizes = [8, 8], strides = [1, 1]} : vector<12x8xf32> to vector<8x8xf32>
    %12 = tpu.concatenate %8, %9, %10, %11 in 1 : vector<8x8xf32>, vector<8x8xf32>, vector<8x8xf32>, vector<8x8xf32> -> vector<8x32xf32>
    %13 = vector.extract_strided_slice %7 {offsets = [1, 0], sizes = [8, 8], strides = [1, 1]} : vector<12x8xf32> to vector<8x8xf32>
    %14 = vector.extract_strided_slice %7 {offsets = [2, 0], sizes = [8, 8], strides = [1, 1]} : vector<12x8xf32> to vector<8x8xf32>
    %15 = vector.extract_strided_slice %7 {offsets = [3, 0], sizes = [8, 8], strides = [1, 1]} : vector<12x8xf32> to vector<8x8xf32>
    %16 = vector.extract_strided_slice %7 {offsets = [4, 0], sizes = [8, 8], strides = [1, 1]} : vector<12x8xf32> to vector<8x8xf32>
    %17 = tpu.concatenate %13, %14, %15, %16 in 1 : vector<8x8xf32>, vector<8x8xf32>, vector<8x8xf32>, vector<8x8xf32> -> vector<8x32xf32>
    %cst_12 = arith.constant dense<0.000000e+00> : vector<8x8xf32>
    %18 = tpu.matmul %12, %4, %cst_12 {dimension_numbers = #tpu.dot_dimension_numbers<[1], [0], [0], [1], [0, 0, 1, 1], [], []>} : vector<8x32xf32>, vector<32x8xf32>, vector<8x8xf32> -> vector<8x8xf32>
    %19 = vector.broadcast %2 : vector<1x8xf32> to vector<8x8xf32>
    %20 = arith.addf %18, %19 : vector<8x8xf32>
    %cst_13 = arith.constant dense<0.000000e+00> : vector<8x8xf32>
    %21 = tpu.matmul %17, %5, %cst_13 {dimension_numbers = #tpu.dot_dimension_numbers<[1], [0], [0], [1], [0, 0, 1, 1], [], []>} : vector<8x32xf32>, vector<32x8xf32>, vector<8x8xf32> -> vector<8x8xf32>
    %22 = vector.broadcast %2 : vector<1x8xf32> to vector<8x8xf32>
    %23 = arith.addf %21, %22 : vector<8x8xf32>
    %24 = tpu.concatenate %20, %23 in 0 : vector<8x8xf32>, vector<8x8xf32> -> vector<16x8xf32>
    %cst_14 = arith.constant dense<0.000000e+00> : vector<16x8xf32>
    %25 = tpu.matmul %3, %24, %cst_14 {dimension_numbers = #tpu.dot_dimension_numbers<[1], [0], [0], [1], [0, 0, 1, 1], [], []>} : vector<16x16xf32>, vector<16x8xf32>, vector<16x8xf32> -> vector<16x8xf32>
    %c0_15 = arith.constant 0 : index
    %c0_16 = arith.constant 0 : index
    %c0_17 = arith.constant 0 : index
    %26 = vector.load %arg0[%c0_15, %c0_16, %c0_17] : memref<2x16x8xf32, #tpu.memory_space<vmem>>, vector<1x16x8xf32>
    %27 = vector.shape_cast %26 : vector<1x16x8xf32> to vector<16x8xf32>
    %28 = tpu.concatenate %27, %25 in 1 : vector<16x8xf32>, vector<16x8xf32> -> vector<16x16xf32>
    %c8 = arith.constant 8 : index
    %c0_18 = arith.constant 0 : index
    %29 = vector.load %arg14[%c8, %c0_18] : memref<56x16xf32, #tpu.memory_space<vmem>>, vector<16x16xf32>
    tpu.vector_store %arg14[%c8, %c0_18], %28 {strides = array<i32>} : memref<56x16xf32, #tpu.memory_space<vmem>>, vector<16x16xf32>,
    %c1 = arith.constant 1 : index
    %c0_19 = arith.constant 0 : index
    %c0_20 = arith.constant 0 : index
    %30 = vector.load %arg1[%c1, %c0_19, %c0_20] : memref<2x12x8xf32, #tpu.memory_space<vmem>>, vector<1x12x8xf32>
    %31 = vector.shape_cast %30 : vector<1x12x8xf32> to vector<12x8xf32>
    %32 = vector.extract_strided_slice %31 {offsets = [0, 0], sizes = [8, 8], strides = [1, 1]} : vector<12x8xf32> to vector<8x8xf32>
    %33 = vector.extract_strided_slice %31 {offsets = [1, 0], sizes = [8, 8], strides = [1, 1]} : vector<12x8xf32> to vector<8x8xf32>
    %34 = vector.extract_strided_slice %31 {offsets = [2, 0], sizes = [8, 8], strides = [1, 1]} : vector<12x8xf32> to vector<8x8xf32>
    %35 = vector.extract_strided_slice %31 {offsets = [3, 0], sizes = [8, 8], strides = [1, 1]} : vector<12x8xf32> to vector<8x8xf32>
    %36 = tpu.concatenate %32, %33, %34, %35 in 1 : vector<8x8xf32>, vector<8x8xf32>, vector<8x8xf32>, vector<8x8xf32> -> vector<8x32xf32>
    %37 = vector.extract_strided_slice %31 {offsets = [1, 0], sizes = [8, 8], strides = [1, 1]} : vector<12x8xf32> to vector<8x8xf32>
    %38 = vector.extract_strided_slice %31 {offsets = [2, 0], sizes = [8, 8], strides = [1, 1]} : vector<12x8xf32> to vector<8x8xf32>
    %39 = vector.extract_strided_slice %31 {offsets = [3, 0], sizes = [8, 8], strides = [1, 1]} : vector<12x8xf32> to vector<8x8xf32>
    %40 = vector.extract_strided_slice %31 {offsets = [4, 0], sizes = [8, 8], strides = [1, 1]} : vector<12x8xf32> to vector<8x8xf32>
    %41 = tpu.concatenate %37, %38, %39, %40 in 1 : vector<8x8xf32>, vector<8x8xf32>, vector<8x8xf32>, vector<8x8xf32> -> vector<8x32xf32>
    %cst_21 = arith.constant dense<0.000000e+00> : vector<8x8xf32>
    %42 = tpu.matmul %36, %4, %cst_21 {dimension_numbers = #tpu.dot_dimension_numbers<[1], [0], [0], [1], [0, 0, 1, 1], [], []>} : vector<8x32xf32>, vector<32x8xf32>, vector<8x8xf32> -> vector<8x8xf32>
    %43 = vector.broadcast %2 : vector<1x8xf32> to vector<8x8xf32>
    %44 = arith.addf %42, %43 : vector<8x8xf32>
    %cst_22 = arith.constant dense<0.000000e+00> : vector<8x8xf32>
    %45 = tpu.matmul %41, %5, %cst_22 {dimension_numbers = #tpu.dot_dimension_numbers<[1], [0], [0], [1], [0, 0, 1, 1], [], []>} : vector<8x32xf32>, vector<32x8xf32>, vector<8x8xf32> -> vector<8x8xf32>
    %46 = vector.broadcast %2 : vector<1x8xf32> to vector<8x8xf32>
    %47 = arith.addf %45, %46 : vector<8x8xf32>
    %48 = tpu.concatenate %44, %47 in 0 : vector<8x8xf32>, vector<8x8xf32> -> vector<16x8xf32>
    %cst_23 = arith.constant dense<0.000000e+00> : vector<16x8xf32>
    %49 = tpu.matmul %3, %48, %cst_23 {dimension_numbers = #tpu.dot_dimension_numbers<[1], [0], [0], [1], [0, 0, 1, 1], [], []>} : vector<16x16xf32>, vector<16x8xf32>, vector<16x8xf32> -> vector<16x8xf32>
    %c1_24 = arith.constant 1 : index
    %c0_25 = arith.constant 0 : index
    %c0_26 = arith.constant 0 : index
    %50 = vector.load %arg0[%c1_24, %c0_25, %c0_26] : memref<2x16x8xf32, #tpu.memory_space<vmem>>, vector<1x16x8xf32>
    %51 = vector.shape_cast %50 : vector<1x16x8xf32> to vector<16x8xf32>
    %52 = tpu.concatenate %51, %49 in 1 : vector<16x8xf32>, vector<16x8xf32> -> vector<16x16xf32>
    %c32 = arith.constant 32 : index
    %c0_27 = arith.constant 0 : index
    %53 = vector.load %arg14[%c32, %c0_27] : memref<56x16xf32, #tpu.memory_space<vmem>>, vector<16x16xf32>
    tpu.vector_store %arg14[%c32, %c0_27], %52 {strides = array<i32>} : memref<56x16xf32, #tpu.memory_space<vmem>>, vector<16x16xf32>,
    %c0_28 = arith.constant 0 : index
    %c0_29 = arith.constant 0 : index
    %54 = vector.load %arg3[%c0_28, %c0_29] : memref<48x1xf32, #tpu.memory_space<vmem>>, vector<48x1xf32>
    %c0_30 = arith.constant 0 : index
    %c0_31 = arith.constant 0 : index
    %55 = vector.load %arg14[%c0_30, %c0_31] : memref<56x16xf32, #tpu.memory_space<vmem>>, vector<56x16xf32>
    %c0_32 = arith.constant 0 : index
    %c0_33 = arith.constant 0 : index
    %56 = vector.load %arg7[%c0_32, %c0_33] : memref<144x8xf32, #tpu.memory_space<vmem>>, vector<144x8xf32>
    %c0_34 = arith.constant 0 : index
    %c0_35 = arith.constant 0 : index
    %57 = vector.load %arg8[%c0_34, %c0_35] : memref<1x8xf32, #tpu.memory_space<vmem>>, vector<1x8xf32>
    %c0_36 = arith.constant 0 : index
    %c0_37 = arith.constant 0 : index
    %58 = vector.load %arg9[%c0_36, %c0_37] : memref<1x8xf32, #tpu.memory_space<vmem>>, vector<1x8xf32>
    %59 = vector.extract_strided_slice %55 {offsets = [0, 0], sizes = [48, 16], strides = [1, 1]} : vector<56x16xf32> to vector<48x16xf32>
    %60 = vector.extract_strided_slice %55 {offsets = [1, 0], sizes = [48, 16], strides = [1, 1]} : vector<56x16xf32> to vector<48x16xf32>
    %61 = vector.extract_strided_slice %55 {offsets = [2, 0], sizes = [48, 16], strides = [1, 1]} : vector<56x16xf32> to vector<48x16xf32>
    %62 = vector.extract_strided_slice %55 {offsets = [3, 0], sizes = [48, 16], strides = [1, 1]} : vector<56x16xf32> to vector<48x16xf32>
    %63 = vector.extract_strided_slice %55 {offsets = [4, 0], sizes = [48, 16], strides = [1, 1]} : vector<56x16xf32> to vector<48x16xf32>
    %64 = vector.extract_strided_slice %55 {offsets = [5, 0], sizes = [48, 16], strides = [1, 1]} : vector<56x16xf32> to vector<48x16xf32>
    %65 = vector.extract_strided_slice %55 {offsets = [6, 0], sizes = [48, 16], strides = [1, 1]} : vector<56x16xf32> to vector<48x16xf32>
    %66 = vector.extract_strided_slice %55 {offsets = [7, 0], sizes = [48, 16], strides = [1, 1]} : vector<56x16xf32> to vector<48x16xf32>
    %67 = vector.extract_strided_slice %55 {offsets = [8, 0], sizes = [48, 16], strides = [1, 1]} : vector<56x16xf32> to vector<48x16xf32>
    %68 = tpu.concatenate %59, %60, %61, %62, %63, %64, %65, %66, %67 in 1 : vector<48x16xf32>, vector<48x16xf32>, vector<48x16xf32>, vector<48x16xf32>, vector<48x16xf32>, vector<48x16xf32>, vector<48x16xf32>, vector<48x16xf32>, vector<48x16xf32> -> vector<48x144xf32>
    %cst_38 = arith.constant dense<0.000000e+00> : vector<48x8xf32>
    %69 = tpu.matmul %68, %56, %cst_38 {dimension_numbers = #tpu.dot_dimension_numbers<[1], [0], [0], [1], [0, 0, 1, 1], [], []>} : vector<48x144xf32>, vector<144x8xf32>, vector<48x8xf32> -> vector<48x8xf32>
    %70 = vector.broadcast %54 : vector<48x1xf32> to vector<48x8xf32>
    %71 = arith.mulf %69, %70 : vector<48x8xf32>
    %cst_39 = arith.constant dense<0.000000e+00> : vector<8xf32>
    %72 = vector.multi_reduction <add>, %71, %cst_39 [0] : vector<48x8xf32> to vector<8xf32>
    %73 = vector.shape_cast %72 : vector<8xf32> to vector<1x8xf32>
    %cst_40 = arith.constant 3.125000e-02 : f32
    %74 = vector.broadcast %cst_40 : f32 to vector<1x8xf32>
    %75 = arith.mulf %73, %74 : vector<1x8xf32>
    %76 = vector.broadcast %75 : vector<1x8xf32> to vector<48x8xf32>
    %77 = arith.subf %69, %76 : vector<48x8xf32>
    %78 = arith.mulf %77, %77 : vector<48x8xf32>
    %79 = vector.broadcast %54 : vector<48x1xf32> to vector<48x8xf32>
    %80 = arith.mulf %79, %78 : vector<48x8xf32>
    %cst_41 = arith.constant dense<0.000000e+00> : vector<8xf32>
    %81 = vector.multi_reduction <add>, %80, %cst_41 [0] : vector<48x8xf32> to vector<8xf32>
    %82 = vector.shape_cast %81 : vector<8xf32> to vector<1x8xf32>
    %cst_42 = arith.constant 3.125000e-02 : f32
    %83 = vector.broadcast %cst_42 : f32 to vector<1x8xf32>
    %84 = arith.mulf %82, %83 : vector<1x8xf32>
    %85 = vector.broadcast %75 : vector<1x8xf32> to vector<48x8xf32>
    %86 = arith.subf %69, %85 : vector<48x8xf32>
    %cst_43 = arith.constant 9.99999974E-6 : f32
    %87 = vector.broadcast %cst_43 : f32 to vector<1x8xf32>
    %88 = arith.addf %84, %87 : vector<1x8xf32>
    %89 = math.rsqrt %88 : vector<1x8xf32>
    %90 = vector.broadcast %89 : vector<1x8xf32> to vector<48x8xf32>
    %91 = arith.mulf %86, %90 : vector<48x8xf32>
    %92 = vector.broadcast %57 : vector<1x8xf32> to vector<48x8xf32>
    %93 = arith.mulf %91, %92 : vector<48x8xf32>
    %94 = vector.broadcast %58 : vector<1x8xf32> to vector<48x8xf32>
    %95 = arith.addf %93, %94 : vector<48x8xf32>
    %cst_44 = arith.constant 0.000000e+00 : f32
    %96 = vector.broadcast %cst_44 : f32 to vector<48x8xf32>
    %97 = arith.maximumf %95, %96 : vector<48x8xf32>
    %98 = vector.broadcast %54 : vector<48x1xf32> to vector<48x8xf32>
    %99 = arith.mulf %97, %98 : vector<48x8xf32>
    %cst_45 = arith.constant 0.000000e+00 : f32
    %100 = vector.broadcast %cst_45 : f32 to vector<4x8xf32>
    %101 = tpu.concatenate %100, %99, %100 in 0 : vector<4x8xf32>, vector<48x8xf32>, vector<4x8xf32> -> vector<56x8xf32>
    %c0_46 = arith.constant 0 : index
    %c0_47 = arith.constant 0 : index
    %102 = vector.load %arg10[%c0_46, %c0_47] : memref<72x8xf32, #tpu.memory_space<vmem>>, vector<72x8xf32>
    %c0_48 = arith.constant 0 : index
    %c0_49 = arith.constant 0 : index
    %103 = vector.load %arg11[%c0_48, %c0_49] : memref<1x8xf32, #tpu.memory_space<vmem>>, vector<1x8xf32>
    %c0_50 = arith.constant 0 : index
    %c0_51 = arith.constant 0 : index
    %104 = vector.load %arg12[%c0_50, %c0_51] : memref<1x8xf32, #tpu.memory_space<vmem>>, vector<1x8xf32>
    %105 = vector.extract_strided_slice %101 {offsets = [0, 0], sizes = [48, 8], strides = [1, 1]} : vector<56x8xf32> to vector<48x8xf32>
    %106 = vector.extract_strided_slice %101 {offsets = [1, 0], sizes = [48, 8], strides = [1, 1]} : vector<56x8xf32> to vector<48x8xf32>
    %107 = vector.extract_strided_slice %101 {offsets = [2, 0], sizes = [48, 8], strides = [1, 1]} : vector<56x8xf32> to vector<48x8xf32>
    %108 = vector.extract_strided_slice %101 {offsets = [3, 0], sizes = [48, 8], strides = [1, 1]} : vector<56x8xf32> to vector<48x8xf32>
    %109 = vector.extract_strided_slice %101 {offsets = [4, 0], sizes = [48, 8], strides = [1, 1]} : vector<56x8xf32> to vector<48x8xf32>
    %110 = vector.extract_strided_slice %101 {offsets = [5, 0], sizes = [48, 8], strides = [1, 1]} : vector<56x8xf32> to vector<48x8xf32>
    %111 = vector.extract_strided_slice %101 {offsets = [6, 0], sizes = [48, 8], strides = [1, 1]} : vector<56x8xf32> to vector<48x8xf32>
    %112 = vector.extract_strided_slice %101 {offsets = [7, 0], sizes = [48, 8], strides = [1, 1]} : vector<56x8xf32> to vector<48x8xf32>
    %113 = vector.extract_strided_slice %101 {offsets = [8, 0], sizes = [48, 8], strides = [1, 1]} : vector<56x8xf32> to vector<48x8xf32>
    %114 = tpu.concatenate %105, %106, %107, %108, %109, %110, %111, %112, %113 in 1 : vector<48x8xf32>, vector<48x8xf32>, vector<48x8xf32>, vector<48x8xf32>, vector<48x8xf32>, vector<48x8xf32>, vector<48x8xf32>, vector<48x8xf32>, vector<48x8xf32> -> vector<48x72xf32>
    %cst_52 = arith.constant dense<0.000000e+00> : vector<48x8xf32>
    %115 = tpu.matmul %114, %102, %cst_52 {dimension_numbers = #tpu.dot_dimension_numbers<[1], [0], [0], [1], [0, 0, 1, 1], [], []>} : vector<48x72xf32>, vector<72x8xf32>, vector<48x8xf32> -> vector<48x8xf32>
    %116 = vector.broadcast %54 : vector<48x1xf32> to vector<48x8xf32>
    %117 = arith.mulf %115, %116 : vector<48x8xf32>
    %cst_53 = arith.constant dense<0.000000e+00> : vector<8xf32>
    %118 = vector.multi_reduction <add>, %117, %cst_53 [0] : vector<48x8xf32> to vector<8xf32>
    %119 = vector.shape_cast %118 : vector<8xf32> to vector<1x8xf32>
    %cst_54 = arith.constant 3.125000e-02 : f32
    %120 = vector.broadcast %cst_54 : f32 to vector<1x8xf32>
    %121 = arith.mulf %119, %120 : vector<1x8xf32>
    %122 = vector.broadcast %121 : vector<1x8xf32> to vector<48x8xf32>
    %123 = arith.subf %115, %122 : vector<48x8xf32>
    %124 = arith.mulf %123, %123 : vector<48x8xf32>
    %125 = vector.broadcast %54 : vector<48x1xf32> to vector<48x8xf32>
    %126 = arith.mulf %125, %124 : vector<48x8xf32>
    %cst_55 = arith.constant dense<0.000000e+00> : vector<8xf32>
    %127 = vector.multi_reduction <add>, %126, %cst_55 [0] : vector<48x8xf32> to vector<8xf32>
    %128 = vector.shape_cast %127 : vector<8xf32> to vector<1x8xf32>
    %cst_56 = arith.constant 3.125000e-02 : f32
    %129 = vector.broadcast %cst_56 : f32 to vector<1x8xf32>
    %130 = arith.mulf %128, %129 : vector<1x8xf32>
    %131 = vector.broadcast %121 : vector<1x8xf32> to vector<48x8xf32>
    %132 = arith.subf %115, %131 : vector<48x8xf32>
    %cst_57 = arith.constant 9.99999974E-6 : f32
    %133 = vector.broadcast %cst_57 : f32 to vector<1x8xf32>
    %134 = arith.addf %130, %133 : vector<1x8xf32>
    %135 = math.rsqrt %134 : vector<1x8xf32>
    %136 = vector.broadcast %135 : vector<1x8xf32> to vector<48x8xf32>
    %137 = arith.mulf %132, %136 : vector<48x8xf32>
    %138 = vector.broadcast %103 : vector<1x8xf32> to vector<48x8xf32>
    %139 = arith.mulf %137, %138 : vector<48x8xf32>
    %140 = vector.broadcast %104 : vector<1x8xf32> to vector<48x8xf32>
    %141 = arith.addf %139, %140 : vector<48x8xf32>
    %cst_58 = arith.constant 0.000000e+00 : f32
    %142 = vector.broadcast %cst_58 : f32 to vector<48x8xf32>
    %143 = arith.maximumf %141, %142 : vector<48x8xf32>
    %144 = vector.broadcast %54 : vector<48x1xf32> to vector<48x8xf32>
    %145 = arith.mulf %143, %144 : vector<48x8xf32>
    %146 = vector.extract_strided_slice %145 {offsets = [4, 0], sizes = [16, 8], strides = [1, 1]} : vector<48x8xf32> to vector<16x8xf32>
    %c0_59 = arith.constant 0 : index
    %c0_60 = arith.constant 0 : index
    %c0_61 = arith.constant 0 : index
    %147 = vector.load %arg13[%c0_59, %c0_60, %c0_61] : memref<2x16x8xf32, #tpu.memory_space<vmem>>, vector<1x16x8xf32>
    %148 = vector.shape_cast %147 : vector<1x16x8xf32> to vector<16x8xf32>
    %149 = vector.shape_cast %146 : vector<16x8xf32> to vector<1x16x8xf32>
    tpu.vector_store %arg13[%c0_59, %c0_60, %c0_61], %149 {strides = array<i32>} : memref<2x16x8xf32, #tpu.memory_space<vmem>>, vector<1x16x8xf32>,
    %150 = vector.extract_strided_slice %145 {offsets = [28, 0], sizes = [16, 8], strides = [1, 1]} : vector<48x8xf32> to vector<16x8xf32>
    %c1_62 = arith.constant 1 : index
    %c0_63 = arith.constant 0 : index
    %c0_64 = arith.constant 0 : index
    %151 = vector.load %arg13[%c1_62, %c0_63, %c0_64] : memref<2x16x8xf32, #tpu.memory_space<vmem>>, vector<1x16x8xf32>
    %152 = vector.shape_cast %151 : vector<1x16x8xf32> to vector<16x8xf32>
    %153 = vector.shape_cast %150 : vector<16x8xf32> to vector<1x16x8xf32>
    tpu.vector_store %arg13[%c1_62, %c0_63, %c0_64], %153 {strides = array<i32>} : memref<2x16x8xf32, #tpu.memory_space<vmem>>, vector<1x16x8xf32>,
    return
  }
}

</mosaic_0001>

<llo_original>
// kernel: unet_up_forward.1
$region0: #{unet_up_forward.1}
  #allocation0 [shape = 'u32[]', space=smem, size = 0x4, offset = 0x4, fixed_abs, tag = 'smem constant byte address 0x4 - core index']
  #allocation1 [shape = 'u32[72,128]{1,0:T(1,128)}', space=vmem, size = 0x9000, scoped, tag = 'internal scratch']
  #allocation2 [shape = 'f32[56,16]{1,0:T(8,128)}', space=vmem, size = 0x7000, scoped, tag = 'scratch operand']
  %s0 = inlined_call_operand.vmem [shape: f32[2,16,8], index: 0, kind: input, shape index: {}]
  %s1 = inlined_call_operand.vmem [shape: f32[2,12,8], index: 1, kind: input, shape index: {}]
  %s2 = inlined_call_operand.vmem [shape: f32[16,16], index: 2, kind: input, shape index: {}]
  %s3 = inlined_call_operand.vmem [shape: f32[48,1], index: 3, kind: input, shape index: {}]
  %s4 = inlined_call_operand.vmem [shape: f32[32,8], index: 4, kind: input, shape index: {}]
  %s5 = inlined_call_operand.vmem [shape: f32[32,8], index: 5, kind: input, shape index: {}]
  %s6 = inlined_call_operand.vmem [shape: f32[1,8], index: 6, kind: input, shape index: {}]
  %s7 = inlined_call_operand.vmem [shape: f32[144,8], index: 7, kind: input, shape index: {}]
  %s8 = inlined_call_operand.vmem [shape: f32[1,8], index: 8, kind: input, shape index: {}]
  %s9 = inlined_call_operand.vmem [shape: f32[1,8], index: 9, kind: input, shape index: {}]
  %s10 = inlined_call_operand.vmem [shape: f32[72,8], index: 10, kind: input, shape index: {}]
  %s11 = inlined_call_operand.vmem [shape: f32[1,8], index: 11, kind: input, shape index: {}]
  %s12 = inlined_call_operand.vmem [shape: f32[1,8], index: 12, kind: input, shape index: {}]
  %s13 = inlined_call_operand.vmem [shape: f32[2,16,8], index: 13, kind: output, shape index: {}]
  %s14 = sld [smem:[#allocation0]]
  $region62: #{unet_up_forward.1} parent=0
    _
  %s16 = ssub.s32 1, %s14
  %s17 = scalar_select 0, %s16, %s14
  // Predicated region
  $region2: #{unet_up_forward.1} parent=0 // pred_check
    _
  $region3: #{unet_up_forward.1} parent=0 // pred_check_branch
    %19 = sbr.rel (0) target = $region5
  $region4: #{unet_up_forward.1} parent=0 // pred_region
    _
  $region5: #{unet_up_forward.1} parent=0 // pred_fallthru
    _
  // Predicated region
  $region6: #{unet_up_forward.1} parent=0 // pred_check
    _
  $region7: #{unet_up_forward.1} parent=0 // pred_check_branch
    %21 = sbr.rel (0) target = $region9
  $region8: #{unet_up_forward.1} parent=0 // pred_region
    _
  $region9: #{unet_up_forward.1} parent=0 // pred_fallthru
    _
  // Predicated region
  $region10: #{unet_up_forward.1} parent=0 // pred_check
    _
  $region11: #{unet_up_forward.1} parent=0 // pred_check_branch
    %23 = sbr.rel (0) target = $region13
  $region12: #{unet_up_forward.1} parent=0 // pred_region
    _
  $region13: #{unet_up_forward.1} parent=0 // pred_fallthru
    _
  // Predicated region
  $region14: #{unet_up_forward.1} parent=0 // pred_check
    _
  $region15: #{unet_up_forward.1} parent=0 // pred_check_branch
    %25 = sbr.rel (0) target = $region17
  $region16: #{unet_up_forward.1} parent=0 // pred_region
    _
  $region17: #{unet_up_forward.1} parent=0 // pred_fallthru
    _
  // Predicated region
  $region18: #{unet_up_forward.1} parent=0 // pred_check
    _
  $region19: #{unet_up_forward.1} parent=0 // pred_check_branch
    %27 = sbr.rel (0) target = $region21
  $region20: #{unet_up_forward.1} parent=0 // pred_region
    _
  $region21: #{unet_up_forward.1} parent=0 // pred_fallthru
    _
  // Predicated region
  $region22: #{unet_up_forward.1} parent=0 // pred_check
    _
  $region23: #{unet_up_forward.1} parent=0 // pred_check_branch
    %29 = sbr.rel (0) target = $region25
  $region24: #{unet_up_forward.1} parent=0 // pred_region
    _
  $region25: #{unet_up_forward.1} parent=0 // pred_fallthru
    _
  // Predicated region
  $region26: #{unet_up_forward.1} parent=0 // pred_check
    _
  $region27: #{unet_up_forward.1} parent=0 // pred_check_branch
    %31 = sbr.rel (0) target = $region29
  $region28: #{unet_up_forward.1} parent=0 // pred_region
    _
  $region29: #{unet_up_forward.1} parent=0 // pred_fallthru
    _
  // Predicated region
  $region30: #{unet_up_forward.1} parent=0 // pred_check
    _
  $region31: #{unet_up_forward.1} parent=0 // pred_check_branch
    %33 = sbr.rel (0) target = $region33
  $region32: #{unet_up_forward.1} parent=0 // pred_region
    _
  $region33: #{unet_up_forward.1} parent=0 // pred_fallthru
    _
  // Predicated region
  $region34: #{unet_up_forward.1} parent=0 // pred_check
    _
  $region35: #{unet_up_forward.1} parent=0 // pred_check_branch
    %35 = sbr.rel (0) target = $region37
  $region36: #{unet_up_forward.1} parent=0 // pred_region
    _
  $region37: #{unet_up_forward.1} parent=0 // pred_fallthru
    _
  // Predicated region
  $region38: #{unet_up_forward.1} parent=0 // pred_check
    _
  $region39: #{unet_up_forward.1} parent=0 // pred_check_branch
    %37 = sbr.rel (0) target = $region41
  $region40: #{unet_up_forward.1} parent=0 // pred_region
    _
  $region41: #{unet_up_forward.1} parent=0 // pred_fallthru
    _
  // Predicated region
  $region42: #{unet_up_forward.1} parent=0 // pred_check
    _
  $region43: #{unet_up_forward.1} parent=0 // pred_check_branch
    %39 = sbr.rel (0) target = $region45
  $region44: #{unet_up_forward.1} parent=0 // pred_region
    _
  $region45: #{unet_up_forward.1} parent=0 // pred_fallthru
    _
  // Predicated region
  $region46: #{unet_up_forward.1} parent=0 // pred_check
    _
  $region47: #{unet_up_forward.1} parent=0 // pred_check_branch
    %41 = sbr.rel (0) target = $region49
  $region48: #{unet_up_forward.1} parent=0 // pred_region
    _
  $region49: #{unet_up_forward.1} parent=0 // pred_fallthru
    _
  // Predicated region
  $region50: #{unet_up_forward.1} parent=0 // pred_check
    _
  $region51: #{unet_up_forward.1} parent=0 // pred_check_branch
    %43 = sbr.rel (0) target = $region53
  $region52: #{unet_up_forward.1} parent=0 // pred_region
    _
  $region53: #{unet_up_forward.1} parent=0 // pred_fallthru
    _
  %vm44 = vcmask 130048
  %45 = vst.msk [vmem:[#allocation2] sm:$0xff] %vm44, 0.0
  %46 = vst.msk [vmem:[#allocation2 + $0x8] sm:$0xff] %vm44, 0.0
  %47 = vst.msk [vmem:[#allocation2 + $0x10] sm:$0xff] %vm44, 0.0
  %48 = vst.msk [vmem:[#allocation2 + $0x18] sm:$0xff] %vm44, 0.0
  %49 = vst.msk [vmem:[#allocation2 + $0x20] sm:$0xff] %vm44, 0.0
  %50 = vst.msk [vmem:[#allocation2 + $0x28] sm:$0xff] %vm44, 0.0
  %51 = vst.msk [vmem:[#allocation2 + $0x30] sm:$0xff] %vm44, 0.0
  %v52 = vld [vmem:[%s6] sm:$0x1]
  %v53 = vld [vmem:[%s2] sm:$0xff]
  %v54 = vld [vmem:[%s2 + $0x8] sm:$0xff]
  %v55 = vld [vmem:[%s4] sm:$0xff]
  %v56 = vld [vmem:[%s4 + $0x8] sm:$0xff]
  %v57 = vld [vmem:[%s4 + $0x10] sm:$0xff]
  %v58 = vld [vmem:[%s4 + $0x18] sm:$0xff]
  %v59 = vld [vmem:[%s5] sm:$0xff]
  %v60 = vld [vmem:[%s5 + $0x8] sm:$0xff]
  %v61 = vld [vmem:[%s5 + $0x10] sm:$0xff]
  %v62 = vld [vmem:[%s5 + $0x18] sm:$0xff]
  %v63 = vld [vmem:[%s1] sm:$0xff]
  %v64 = vld [vmem:[%s1 + $0x8] sm:$0xf]
  %vm67 = vcmask 1046528
  %v68 = vrot.slane %v63, 1
  %v69 = vrot.slane %v64, 1
  %v70 = vsel %vm67, %v68, %v69
  %71 = vrot.lane.b32.xlu0 %v70, 8
  %v72 = vpop.permute.xlu0 %71
  %vm74 = vcmask 1045504
  %v75 = vrot.slane %v63, 2
  %v76 = vrot.slane %v64, 2
  %v77 = vsel %vm74, %v75, %v76
  %78 = vrot.lane.b32.xlu0 %v77, 16
  %v79 = vpop.permute.xlu0 %78
  %vm81 = vcmask 1044480
  %v82 = vrot.slane %v63, 3
  %v83 = vrot.slane %v64, 3
  %v84 = vsel %vm81, %v82, %v83
  %85 = vrot.lane.b32.xlu0 %v84, 24
  %v86 = vpop.permute.xlu0 %85
  %vm88 = vcmask 64512
  %v89 = vsel %vm88, %v63, %v72
  %v90 = vsel %vm44, %v89, %v79
  %vm91 = vcmask 195584
  %v92 = vsel %vm91, %v90, %v86
  %93 = vrot.lane.b32.xlu0 %v69, 8
  %v94 = vpop.permute.xlu0 %93
  %96 = vrot.lane.b32.xlu0 %v76, 16
  %v97 = vpop.permute.xlu0 %96
  %99 = vrot.lane.b32.xlu0 %v83, 24
  %v100 = vpop.permute.xlu0 %99
  %v102 = vsel %vm88, %v64, %v94
  %v103 = vsel %vm44, %v102, %v97
  %v104 = vsel %vm91, %v103, %v100
  %v106 = vperm.slane %v52, 0
  %vm108 = vcmask 261120
  %v110 = vsel %vm108, %v92, 0
  %112 = vmatpush.msra.mxu0 0.0
  %113 = vmatpush.msra.mxu0 0.0
  %114 = vmatpush.msra.mxu0 0.0
  %115 = vmatpush.msra.mxu0 0.0
  %116 = vmatpush.msra.mxu0 0.0
  %117 = vmatpush.msra.mxu0 0.0
  %118 = vmatpush.msra.mxu0 0.0
  %119 = vmatpush.msra.mxu0 0.0
  %120 = vmatpush.msra.mxu0 0.0
  %121 = vmatpush.msra.mxu0 0.0
  %122 = vmatpush.msra.mxu0 0.0
  %123 = vmatpush.msra.mxu0 0.0
  %124 = vmatpush.msra.mxu0 %v58
  %125 = vmatpush.msra.mxu0 %v57
  %126 = vmatpush.msra.mxu0 %v56
  %127 = vmatpush.msra.mxu0 %v55
  %128 = vmatmul.f32.gmra.mxu0 %v110
  %v129 = vpop.f32.mrf.mxu0
  %v130 = vadd.f32 %v106, %v129
  %131 = vdwg.mxu0
  %v133 = vrot.slane %v92, 1
  %v134 = vrot.slane %v104, 1
  %v135 = vsel %vm67, %v133, %v134
  %v136 = vsel %vm108, %v135, 0
  %138 = vmatpush.msra.mxu0 0.0
  %139 = vmatpush.msra.mxu0 0.0
  %140 = vmatpush.msra.mxu0 0.0
  %141 = vmatpush.msra.mxu0 0.0
  %142 = vmatpush.msra.mxu0 0.0
  %143 = vmatpush.msra.mxu0 0.0
  %144 = vmatpush.msra.mxu0 0.0
  %145 = vmatpush.msra.mxu0 0.0
  %146 = vmatpush.msra.mxu0 0.0
  %147 = vmatpush.msra.mxu0 0.0
  %148 = vmatpush.msra.mxu0 0.0
  %149 = vmatpush.msra.mxu0 0.0
  %150 = vmatpush.msra.mxu0 %v62
  %151 = vmatpush.msra.mxu0 %v61
  %152 = vmatpush.msra.mxu0 %v60
  %153 = vmatpush.msra.mxu0 %v59
  %154 = vmatmul.f32.gmra.mxu0 %v136
  %v155 = vpop.f32.mrf.mxu0
  %v156 = vadd.f32 %v106, %v155
  %157 = vdwg.mxu0
  %v159 = vsel %vm44, %v53, 0
  %v162 = vsel %vm44, %v54, 0
  %164 = vmatpush.msra.mxu0 0.0
  %165 = vmatpush.msra.mxu0 0.0
  %166 = vmatpush.msra.mxu0 0.0
  %167 = vmatpush.msra.mxu0 0.0
  %168 = vmatpush.msra.mxu0 0.0
  %169 = vmatpush.msra.mxu0 0.0
  %170 = vmatpush.msra.mxu0 0.0
  %171 = vmatpush.msra.mxu0 0.0
  %172 = vmatpush.msra.mxu0 0.0
  %173 = vmatpush.msra.mxu0 0.0
  %174 = vmatpush.msra.mxu0 0.0
  %175 = vmatpush.msra.mxu0 0.0
  %176 = vmatpush.msra.mxu0 0.0
  %177 = vmatpush.msra.mxu0 0.0
  %178 = vmatpush.msra.mxu0 %v156
  %179 = vmatpush.msra.mxu0 %v130
  %180 = vmatmul.f32.gmra.mxu0 %v159
  %v181 = vpop.f32.mrf.mxu0
  %v182 = vadd.f32 0.0, %v181
  %183 = vmatmul.f32.gmra.mxu0 %v162
  %v184 = vpop.f32.mrf.mxu0
  %v185 = vadd.f32 0.0, %v184
  %186 = vdwg.mxu0
  %v187 = vld [vmem:[%s0] sm:$0xff]
  %v188 = vld [vmem:[%s0 + $0x8] sm:$0xff]
  %191 = vrot.lane.b32.xlu0 %v182, 8
  %v192 = vpop.permute.xlu0 %191
  %193 = vrot.lane.b32.xlu0 %v185, 8
  %v194 = vpop.permute.xlu0 %193
  %v197 = vsel %vm88, %v187, %v192
  %v198 = vsel %vm88, %v188, %v194
  %199 = vst.msk [vmem:[#allocation2 + $0x8] sm:$0xff] %vm44, %v197
  %200 = vst.msk [vmem:[#allocation2 + $0x10] sm:$0xff] %vm44, %v198
  %s201 = scalar_lea.vmem %s1, 16
  %v202 = vld [vmem:[%s201] sm:$0xff]
  %v203 = vld [vmem:[%s201 + $0x8] sm:$0xf]
  %v206 = vrot.slane %v202, 1
  %v207 = vrot.slane %v203, 1
  %v208 = vsel %vm67, %v206, %v207
  %209 = vrot.lane.b32.xlu0 %v208, 8
  %v210 = vpop.permute.xlu0 %209
  %v212 = vrot.slane %v202, 2
  %v213 = vrot.slane %v203, 2
  %v214 = vsel %vm74, %v212, %v213
  %215 = vrot.lane.b32.xlu0 %v214, 16
  %v216 = vpop.permute.xlu0 %215
  %v218 = vrot.slane %v202, 3
  %v219 = vrot.slane %v203, 3
  %v220 = vsel %vm81, %v218, %v219
  %221 = vrot.lane.b32.xlu0 %v220, 24
  %v222 = vpop.permute.xlu0 %221
  %v224 = vsel %vm88, %v202, %v210
  %v225 = vsel %vm44, %v224, %v216
  %v226 = vsel %vm91, %v225, %v222
  %227 = vrot.lane.b32.xlu0 %v207, 8
  %v228 = vpop.permute.xlu0 %227
  %230 = vrot.lane.b32.xlu0 %v213, 16
  %v231 = vpop.permute.xlu0 %230
  %233 = vrot.lane.b32.xlu0 %v219, 24
  %v234 = vpop.permute.xlu0 %233
  %v236 = vsel %vm88, %v203, %v228
  %v237 = vsel %vm44, %v236, %v231
  %v238 = vsel %vm91, %v237, %v234
  %v240 = vsel %vm108, %v226, 0
  %242 = vmatpush.msra.mxu0 0.0
  %243 = vmatpush.msra.mxu0 0.0
  %244 = vmatpush.msra.mxu0 0.0
  %245 = vmatpush.msra.mxu0 0.0
  %246 = vmatpush.msra.mxu0 0.0
  %247 = vmatpush.msra.mxu0 0.0
  %248 = vmatpush.msra.mxu0 0.0
  %249 = vmatpush.msra.mxu0 0.0
  %250 = vmatpush.msra.mxu0 0.0
  %251 = vmatpush.msra.mxu0 0.0
  %252 = vmatpush.msra.mxu0 0.0
  %253 = vmatpush.msra.mxu0 0.0
  %254 = vmatpush.msra.mxu0 %v58
  %255 = vmatpush.msra.mxu0 %v57
  %256 = vmatpush.msra.mxu0 %v56
  %257 = vmatpush.msra.mxu0 %v55
  %258 = vmatmul.f32.gmra.mxu0 %v240
  %v259 = vpop.f32.mrf.mxu0
  %v260 = vadd.f32 %v106, %v259
  %261 = vdwg.mxu0
  %v263 = vrot.slane %v226, 1
  %v264 = vrot.slane %v238, 1
  %v265 = vsel %vm67, %v263, %v264
  %v266 = vsel %vm108, %v265, 0
  %268 = vmatpush.msra.mxu0 0.0
  %269 = vmatpush.msra.mxu0 0.0
  %270 = vmatpush.msra.mxu0 0.0
  %271 = vmatpush.msra.mxu0 0.0
  %272 = vmatpush.msra.mxu0 0.0
  %273 = vmatpush.msra.mxu0 0.0
  %274 = vmatpush.msra.mxu0 0.0
  %275 = vmatpush.msra.mxu0 0.0
  %276 = vmatpush.msra.mxu0 0.0
  %277 = vmatpush.msra.mxu0 0.0
  %278 = vmatpush.msra.mxu0 0.0
  %279 = vmatpush.msra.mxu0 0.0
  %280 = vmatpush.msra.mxu0 %v62
  %281 = vmatpush.msra.mxu0 %v61
  %282 = vmatpush.msra.mxu0 %v60
  %283 = vmatpush.msra.mxu0 %v59
  %284 = vmatmul.f32.gmra.mxu0 %v266
  %v285 = vpop.f32.mrf.mxu0
  %v286 = vadd.f32 %v106, %v285
  %287 = vdwg.mxu0
  %288 = vmatpush.msra.mxu0 0.0
  %289 = vmatpush.msra.mxu0 0.0
  %290 = vmatpush.msra.mxu0 0.0
  %291 = vmatpush.msra.mxu0 0.0
  %292 = vmatpush.msra.mxu0 0.0
  %293 = vmatpush.msra.mxu0 0.0
  %294 = vmatpush.msra.mxu0 0.0
  %295 = vmatpush.msra.mxu0 0.0
  %296 = vmatpush.msra.mxu0 0.0
  %297 = vmatpush.msra.mxu0 0.0
  %298 = vmatpush.msra.mxu0 0.0
  %299 = vmatpush.msra.mxu0 0.0
  %300 = vmatpush.msra.mxu0 0.0
  %301 = vmatpush.msra.mxu0 0.0
  %302 = vmatpush.msra.mxu0 %v286
  %303 = vmatpush.msra.mxu0 %v260
  %304 = vmatmul.f32.gmra.mxu0 %v159
  %v305 = vpop.f32.mrf.mxu0
  %v306 = vadd.f32 0.0, %v305
  %307 = vmatmul.f32.gmra.mxu0 %v162
  %v308 = vpop.f32.mrf.mxu0
  %v309 = vadd.f32 0.0, %v308
  %310 = vdwg.mxu0
  %s311 = scalar_lea.vmem %s0, 16
  %v312 = vld [vmem:[%s311] sm:$0xff]
  %v313 = vld [vmem:[%s311 + $0x8] sm:$0xff]
  %316 = vrot.lane.b32.xlu0 %v306, 8
  %v317 = vpop.permute.xlu0 %316
  %318 = vrot.lane.b32.xlu0 %v309, 8
  %v319 = vpop.permute.xlu0 %318
  %v322 = vsel %vm88, %v312, %v317
  %v323 = vsel %vm88, %v313, %v319
  %324 = vst.msk [vmem:[#allocation2 + $0x20] sm:$0xff] %vm44, %v322
  %325 = vst.msk [vmem:[#allocation2 + $0x28] sm:$0xff] %vm44, %v323
  %v326 = vld [vmem:[%s3] sm:$0xff]
  %v327 = vld [vmem:[%s3 + $0x8] sm:$0xff]
  %v328 = vld [vmem:[%s3 + $0x10] sm:$0xff]
  %v329 = vld [vmem:[%s3 + $0x18] sm:$0xff]
  %v330 = vld [vmem:[%s3 + $0x20] sm:$0xff]
  %v331 = vld [vmem:[%s3 + $0x28] sm:$0xff]
  %v332 = vld [vmem:[#allocation2] sm:$0xff]
  %v333 = vld [vmem:[#allocation2 + $0x8] sm:$0xff]
  %v334 = vld [vmem:[#allocation2 + $0x10] sm:$0xff]
  %v335 = vld [vmem:[#allocation2 + $0x18] sm:$0xff]
  %v336 = vld [vmem:[#allocation2 + $0x20] sm:$0xff]
  %v337 = vld [vmem:[#allocation2 + $0x28] sm:$0xff]
  %v338 = vld [vmem:[#allocation2 + $0x30] sm:$0xff]
  %v339 = vld [vmem:[%s7] sm:$0xff]
  %v340 = vld [vmem:[%s7 + $0x8] sm:$0xff]
  %v341 = vld [vmem:[%s7 + $0x10] sm:$0xff]
  %v342 = vld [vmem:[%s7 + $0x18] sm:$0xff]
  %v343 = vld [vmem:[%s7 + $0x20] sm:$0xff]
  %v344 = vld [vmem:[%s7 + $0x28] sm:$0xff]
  %v345 = vld [vmem:[%s7 + $0x30] sm:$0xff]
  %v346 = vld [vmem:[%s7 + $0x38] sm:$0xff]
  %v347 = vld [vmem:[%s7 + $0x40] sm:$0xff]
  %v348 = vld [vmem:[%s7 + $0x48] sm:$0xff]
  %v349 = vld [vmem:[%s7 + $0x50] sm:$0xff]
  %v350 = vld [vmem:[%s7 + $0x58] sm:$0xff]
  %v351 = vld [vmem:[%s7 + $0x60] sm:$0xff]
  %v352 = vld [vmem:[%s7 + $0x68] sm:$0xff]
  %v353 = vld [vmem:[%s7 + $0x70] sm:$0xff]
  %v354 = vld [vmem:[%s7 + $0x78] sm:$0xff]
  %v355 = vld [vmem:[%s7 + $0x80] sm:$0xff]
  %v356 = vld [vmem:[%s7 + $0x88] sm:$0xff]
  %v357 = vld [vmem:[%s8] sm:$0x1]
  %v358 = vld [vmem:[%s9] sm:$0x1]
  %v366 = vrot.slane %v332, 1
  %v367 = vrot.slane %v333, 1
  %v368 = vsel %vm67, %v366, %v367
  %v369 = vrot.slane %v334, 1
  %v370 = vsel %vm67, %v367, %v369
  %v371 = vrot.slane %v335, 1
  %v372 = vsel %vm67, %v369, %v371
  %v373 = vrot.slane %v336, 1
  %v374 = vsel %vm67, %v371, %v373
  %v375 = vrot.slane %v337, 1
  %v376 = vsel %vm67, %v373, %v375
  %v377 = vrot.slane %v338, 1
  %v378 = vsel %vm67, %v375, %v377
  %379 = vrot.lane.b32.xlu0 %v368, 16
  %v380 = vpop.permute.xlu0 %379
  %381 = vrot.lane.b32.xlu0 %v370, 16
  %v382 = vpop.permute.xlu0 %381
  %383 = vrot.lane.b32.xlu0 %v372, 16
  %v384 = vpop.permute.xlu0 %383
  %385 = vrot.lane.b32.xlu0 %v374, 16
  %v386 = vpop.permute.xlu0 %385
  %387 = vrot.lane.b32.xlu0 %v376, 16
  %v388 = vpop.permute.xlu0 %387
  %389 = vrot.lane.b32.xlu0 %v378, 16
  %v390 = vpop.permute.xlu0 %389
  %v397 = vrot.slane %v332, 2
  %v398 = vrot.slane %v333, 2
  %v399 = vsel %vm74, %v397, %v398
  %v400 = vrot.slane %v334, 2
  %v401 = vsel %vm74, %v398, %v400
  %v402 = vrot.slane %v335, 2
  %v403 = vsel %vm74, %v400, %v402
  %v404 = vrot.slane %v336, 2
  %v405 = vsel %vm74, %v402, %v404
  %v406 = vrot.slane %v337, 2
  %v407 = vsel %vm74, %v404, %v406
  %v408 = vrot.slane %v338, 2
  %v409 = vsel %vm74, %v406, %v408
  %410 = vrot.lane.b32.xlu0 %v399, 32
  %v411 = vpop.permute.xlu0 %410
  %412 = vrot.lane.b32.xlu0 %v401, 32
  %v413 = vpop.permute.xlu0 %412
  %414 = vrot.lane.b32.xlu0 %v403, 32
  %v415 = vpop.permute.xlu0 %414
  %416 = vrot.lane.b32.xlu0 %v405, 32
  %v417 = vpop.permute.xlu0 %416
  %418 = vrot.lane.b32.xlu0 %v407, 32
  %v419 = vpop.permute.xlu0 %418
  %420 = vrot.lane.b32.xlu0 %v409, 32
  %v421 = vpop.permute.xlu0 %420
  %v428 = vrot.slane %v332, 3
  %v429 = vrot.slane %v333, 3
  %v430 = vsel %vm81, %v428, %v429
  %v431 = vrot.slane %v334, 3
  %v432 = vsel %vm81, %v429, %v431
  %v433 = vrot.slane %v335, 3
  %v434 = vsel %vm81, %v431, %v433
  %v435 = vrot.slane %v336, 3
  %v436 = vsel %vm81, %v433, %v435
  %v437 = vrot.slane %v337, 3
  %v438 = vsel %vm81, %v435, %v437
  %v439 = vrot.slane %v338, 3
  %v440 = vsel %vm81, %v437, %v439
  %441 = vrot.lane.b32.xlu0 %v430, 48
  %v442 = vpop.permute.xlu0 %441
  %443 = vrot.lane.b32.xlu0 %v432, 48
  %v444 = vpop.permute.xlu0 %443
  %445 = vrot.lane.b32.xlu0 %v434, 48
  %v446 = vpop.permute.xlu0 %445
  %447 = vrot.lane.b32.xlu0 %v436, 48
  %v448 = vpop.permute.xlu0 %447
  %449 = vrot.lane.b32.xlu0 %v438, 48
  %v450 = vpop.permute.xlu0 %449
  %451 = vrot.lane.b32.xlu0 %v440, 48
  %v452 = vpop.permute.xlu0 %451
  %vm459 = vcmask 1043456
  %v460 = vrot.slane %v332, 4
  %v461 = vrot.slane %v333, 4
  %v462 = vsel %vm459, %v460, %v461
  %v463 = vrot.slane %v334, 4
  %v464 = vsel %vm459, %v461, %v463
  %v465 = vrot.slane %v335, 4
  %v466 = vsel %vm459, %v463, %v465
  %v467 = vrot.slane %v336, 4
  %v468 = vsel %vm459, %v465, %v467
  %v469 = vrot.slane %v337, 4
  %v470 = vsel %vm459, %v467, %v469
  %v471 = vrot.slane %v338, 4
  %v472 = vsel %vm459, %v469, %v471
  %473 = vrot.lane.b32.xlu0 %v462, 64
  %v474 = vpop.permute.xlu0 %473
  %475 = vrot.lane.b32.xlu0 %v464, 64
  %v476 = vpop.permute.xlu0 %475
  %477 = vrot.lane.b32.xlu0 %v466, 64
  %v478 = vpop.permute.xlu0 %477
  %479 = vrot.lane.b32.xlu0 %v468, 64
  %v480 = vpop.permute.xlu0 %479
  %481 = vrot.lane.b32.xlu0 %v470, 64
  %v482 = vpop.permute.xlu0 %481
  %483 = vrot.lane.b32.xlu0 %v472, 64
  %v484 = vpop.permute.xlu0 %483
  %vm491 = vcmask 1042432
  %v492 = vrot.slane %v332, 5
  %v493 = vrot.slane %v333, 5
  %v494 = vsel %vm491, %v492, %v493
  %v495 = vrot.slane %v334, 5
  %v496 = vsel %vm491, %v493, %v495
  %v497 = vrot.slane %v335, 5
  %v498 = vsel %vm491, %v495, %v497
  %v499 = vrot.slane %v336, 5
  %v500 = vsel %vm491, %v497, %v499
  %v501 = vrot.slane %v337, 5
  %v502 = vsel %vm491, %v499, %v501
  %v503 = vrot.slane %v338, 5
  %v504 = vsel %vm491, %v501, %v503
  %505 = vrot.lane.b32.xlu0 %v494, 80
  %v506 = vpop.permute.xlu0 %505
  %507 = vrot.lane.b32.xlu0 %v496, 80
  %v508 = vpop.permute.xlu0 %507
  %509 = vrot.lane.b32.xlu0 %v498, 80
  %v510 = vpop.permute.xlu0 %509
  %511 = vrot.lane.b32.xlu0 %v500, 80
  %v512 = vpop.permute.xlu0 %511
  %513 = vrot.lane.b32.xlu0 %v502, 80
  %v514 = vpop.permute.xlu0 %513
  %515 = vrot.lane.b32.xlu0 %v504, 80
  %v516 = vpop.permute.xlu0 %515
  %vm523 = vcmask 1041408
  %v524 = vrot.slane %v332, 6
  %v525 = vrot.slane %v333, 6
  %v526 = vsel %vm523, %v524, %v525
  %v527 = vrot.slane %v334, 6
  %v528 = vsel %vm523, %v525, %v527
  %v529 = vrot.slane %v335, 6
  %v530 = vsel %vm523, %v527, %v529
  %v531 = vrot.slane %v336, 6
  %v532 = vsel %vm523, %v529, %v531
  %v533 = vrot.slane %v337, 6
  %v534 = vsel %vm523, %v531, %v533
  %v535 = vrot.slane %v338, 6
  %v536 = vsel %vm523, %v533, %v535
  %537 = vrot.lane.b32.xlu0 %v526, 96
  %v538 = vpop.permute.xlu0 %537
  %539 = vrot.lane.b32.xlu0 %v528, 96
  %v540 = vpop.permute.xlu0 %539
  %541 = vrot.lane.b32.xlu0 %v530, 96
  %v542 = vpop.permute.xlu0 %541
  %543 = vrot.lane.b32.xlu0 %v532, 96
  %v544 = vpop.permute.xlu0 %543
  %545 = vrot.lane.b32.xlu0 %v534, 96
  %v546 = vpop.permute.xlu0 %545
  %547 = vrot.lane.b32.xlu0 %v536, 96
  %v548 = vpop.permute.xlu0 %547
  %vm555 = vcmask 1040384
  %v556 = vrot.slane %v332, 7
  %v557 = vrot.slane %v333, 7
  %v558 = vsel %vm555, %v556, %v557
  %v559 = vrot.slane %v334, 7
  %v560 = vsel %vm555, %v557, %v559
  %v561 = vrot.slane %v335, 7
  %v562 = vsel %vm555, %v559, %v561
  %v563 = vrot.slane %v336, 7
  %v564 = vsel %vm555, %v561, %v563
  %v565 = vrot.slane %v337, 7
  %v566 = vsel %vm555, %v563, %v565
  %v567 = vrot.slane %v338, 7
  %v568 = vsel %vm555, %v565, %v567
  %569 = vrot.lane.b32.xlu0 %v558, 112
  %v570 = vpop.permute.xlu0 %569
  %571 = vrot.lane.b32.xlu0 %v560, 112
  %v572 = vpop.permute.xlu0 %571
  %573 = vrot.lane.b32.xlu0 %v562, 112
  %v574 = vpop.permute.xlu0 %573
  %575 = vrot.lane.b32.xlu0 %v564, 112
  %v576 = vpop.permute.xlu0 %575
  %577 = vrot.lane.b32.xlu0 %v566, 112
  %v578 = vpop.permute.xlu0 %577
  %579 = vrot.lane.b32.xlu0 %v568, 112
  %v580 = vpop.permute.xlu0 %579
  %v587 = vsel %vm44, %v332, %v380
  %v588 = vsel %vm44, %v333, %v382
  %v589 = vsel %vm44, %v334, %v384
  %v590 = vsel %vm44, %v335, %v386
  %v591 = vsel %vm44, %v336, %v388
  %v592 = vsel %vm44, %v337, %v390
  %v593 = vsel %vm108, %v587, %v411
  %v594 = vsel %vm108, %v588, %v413
  %v595 = vsel %vm108, %v589, %v415
  %v596 = vsel %vm108, %v590, %v417
  %v597 = vsel %vm108, %v591, %v419
  %v598 = vsel %vm108, %v592, %v421
  %vm599 = vcmask 392192
  %v600 = vsel %vm599, %v593, %v442
  %v601 = vsel %vm599, %v594, %v444
  %v602 = vsel %vm599, %v595, %v446
  %v603 = vsel %vm599, %v596, %v448
  %v604 = vsel %vm599, %v597, %v450
  %v605 = vsel %vm599, %v598, %v452
  %vm606 = vcmask 523264
  %v607 = vsel %vm606, %v600, %v474
  %v608 = vsel %vm606, %v601, %v476
  %v609 = vsel %vm606, %v602, %v478
  %v610 = vsel %vm606, %v603, %v480
  %v611 = vsel %vm606, %v604, %v482
  %v612 = vsel %vm606, %v605, %v484
  %vm613 = vcmask 654336
  %v614 = vsel %vm613, %v607, %v506
  %v615 = vsel %vm613, %v608, %v508
  %v616 = vsel %vm613, %v609, %v510
  %v617 = vsel %vm613, %v610, %v512
  %v618 = vsel %vm613, %v611, %v514
  %v619 = vsel %vm613, %v612, %v516
  %vm620 = vcmask 785408
  %v621 = vsel %vm620, %v614, %v538
  %v622 = vsel %vm620, %v615, %v540
  %v623 = vsel %vm620, %v616, %v542
  %v624 = vsel %vm620, %v617, %v544
  %v625 = vsel %vm620, %v618, %v546
  %v626 = vsel %vm620, %v619, %v548
  %vm627 = vcmask 916480
  %v628 = vsel %vm627, %v621, %v570
  %v629 = vsel %vm627, %v622, %v572
  %v630 = vsel %vm627, %v623, %v574
  %v631 = vsel %vm627, %v624, %v576
  %v632 = vsel %vm627, %v625, %v578
  %v633 = vsel %vm627, %v626, %v580
  %v634 = vsel %vm44, %v333, 0
  %v636 = vsel %vm44, %v334, 0
  %v638 = vsel %vm44, %v335, 0
  %v640 = vsel %vm44, %v336, 0
  %v642 = vsel %vm44, %v337, 0
  %v644 = vsel %vm44, %v338, 0
  %646 = vmatpush.msra.mxu0 %v354
  %647 = vmatpush.msra.mxu0 %v353
  %648 = vmatpush.msra.mxu0 %v352
  %649 = vmatpush.msra.mxu0 %v351
  %650 = vmatpush.msra.mxu0 %v350
  %651 = vmatpush.msra.mxu0 %v349
  %652 = vmatpush.msra.mxu0 %v348
  %653 = vmatpush.msra.mxu0 %v347
  %654 = vmatpush.msra.mxu0 %v346
  %655 = vmatpush.msra.mxu0 %v345
  %656 = vmatpush.msra.mxu0 %v344
  %657 = vmatpush.msra.mxu0 %v343
  %658 = vmatpush.msra.mxu0 %v342
  %659 = vmatpush.msra.mxu0 %v341
  %660 = vmatpush.msra.mxu0 %v340
  %661 = vmatpush.msra.mxu0 %v339
  %662 = vmatmul.f32.gmra.mxu0 %v628
  %v663 = vpop.f32.mrf.mxu0
  %v664 = vadd.f32 0.0, %v663
  %665 = vmatmul.f32.gmra.mxu0 %v629
  %v666 = vpop.f32.mrf.mxu0
  %v667 = vadd.f32 0.0, %v666
  %668 = vmatmul.f32.gmra.mxu0 %v630
  %v669 = vpop.f32.mrf.mxu0
  %v670 = vadd.f32 0.0, %v669
  %671 = vmatmul.f32.gmra.mxu0 %v631
  %v672 = vpop.f32.mrf.mxu0
  %v673 = vadd.f32 0.0, %v672
  %674 = vmatmul.f32.gmra.mxu0 %v632
  %v675 = vpop.f32.mrf.mxu0
  %v676 = vadd.f32 0.0, %v675
  %677 = vmatmul.f32.gmra.mxu0 %v633
  %v678 = vpop.f32.mrf.mxu0
  %v679 = vadd.f32 0.0, %v678
  %680 = vdwg.mxu0
  %681 = vmatpush.msra.mxu0 0.0
  %682 = vmatpush.msra.mxu0 0.0
  %683 = vmatpush.msra.mxu0 0.0
  %684 = vmatpush.msra.mxu0 0.0
  %685 = vmatpush.msra.mxu0 0.0
  %686 = vmatpush.msra.mxu0 0.0
  %687 = vmatpush.msra.mxu0 0.0
  %688 = vmatpush.msra.mxu0 0.0
  %689 = vmatpush.msra.mxu0 0.0
  %690 = vmatpush.msra.mxu0 0.0
  %691 = vmatpush.msra.mxu0 0.0
  %692 = vmatpush.msra.mxu0 0.0
  %693 = vmatpush.msra.mxu0 0.0
  %694 = vmatpush.msra.mxu0 0.0
  %695 = vmatpush.msra.mxu0 %v356
  %696 = vmatpush.msra.mxu0 %v355
  %697 = vmatmul.f32.gmra.mxu0 %v634
  %v698 = vpop.f32.mrf.mxu0
  %v699 = vadd.f32 %v664, %v698
  %700 = vmatmul.f32.gmra.mxu0 %v636
  %v701 = vpop.f32.mrf.mxu0
  %v702 = vadd.f32 %v667, %v701
  %703 = vmatmul.f32.gmra.mxu0 %v638
  %v704 = vpop.f32.mrf.mxu0
  %v705 = vadd.f32 %v670, %v704
  %706 = vmatmul.f32.gmra.mxu0 %v640
  %v707 = vpop.f32.mrf.mxu0
  %v708 = vadd.f32 %v673, %v707
  %709 = vmatmul.f32.gmra.mxu0 %v642
  %v710 = vpop.f32.mrf.mxu0
  %v711 = vadd.f32 %v676, %v710
  %712 = vmatmul.f32.gmra.mxu0 %v644
  %v713 = vpop.f32.mrf.mxu0
  %v714 = vadd.f32 %v679, %v713
  %715 = vdwg.mxu0
  %717 = vset.pattern.permute.xlu0 0
  %718 = vperm.xlu0 %717, %v326
  %v719 = vpop.permute.xlu0 %718
  %722 = vset.pattern.permute.xlu0 0
  %723 = vperm.xlu0 %722, %v327
  %v724 = vpop.permute.xlu0 %723
  %727 = vset.pattern.permute.xlu0 0
  %728 = vperm.xlu0 %727, %v328
  %v729 = vpop.permute.xlu0 %728
  %732 = vset.pattern.permute.xlu0 0
  %733 = vperm.xlu0 %732, %v329
  %v734 = vpop.permute.xlu0 %733
  %737 = vset.pattern.permute.xlu0 0
  %738 = vperm.xlu0 %737, %v330
  %v739 = vpop.permute.xlu0 %738
  %742 = vset.pattern.permute.xlu0 0
  %743 = vperm.xlu0 %742, %v331
  %v744 = vpop.permute.xlu0 %743
  %v746 = vmul.f32 %v699, %v719
  %v747 = vmul.f32 %v702, %v724
  %v748 = vmul.f32 %v705, %v729
  %v749 = vmul.f32 %v708, %v734
  %v750 = vmul.f32 %v711, %v739
  %v751 = vmul.f32 %v714, %v744
  %v752 = vsel %vm88, %v746, 0.0
  %v753 = vsel %vm88, %v747, 0.0
  %v754 = vadd.f32 %v752, %v753
  %v755 = vsel %vm88, %v748, 0.0
  %v756 = vadd.f32 %v754, %v755
  %v757 = vsel %vm88, %v749, 0.0
  %v758 = vadd.f32 %v756, %v757
  %v759 = vsel %vm88, %v750, 0.0
  %v760 = vadd.f32 %v758, %v759
  %v761 = vsel %vm88, %v751, 0.0
  %v762 = vadd.f32 %v760, %v761
  %v763 = vrot.slane %v762, 4
  %v764 = vadd.f32 %v762, %v763
  %v765 = vrot.slane %v764, 2
  %v766 = vadd.f32 %v764, %v765
  %v767 = vrot.slane %v766, 1
  %v768 = vadd.f32 %v766, %v767
  %v769 = vmul.f32 %v768, 0.03125
  %v770 = vsub.f32 %v699, %v769
  %v771 = vsub.f32 %v702, %v769
  %v772 = vsub.f32 %v705, %v769
  %v773 = vsub.f32 %v708, %v769
  %v774 = vsub.f32 %v711, %v769
  %v775 = vsub.f32 %v714, %v769
  %v776 = vmul.f32 %v770, %v770
  %v777 = vmul.f32 %v771, %v771
  %v778 = vmul.f32 %v772, %v772
  %v779 = vmul.f32 %v773, %v773
  %v780 = vmul.f32 %v774, %v774
  %v781 = vmul.f32 %v775, %v775
  %v782 = vmul.f32 %v719, %v776
  %v783 = vmul.f32 %v724, %v777
  %v784 = vmul.f32 %v729, %v778
  %v785 = vmul.f32 %v734, %v779
  %v786 = vmul.f32 %v739, %v780
  %v787 = vmul.f32 %v744, %v781
  %v788 = vsel %vm88, %v782, 0.0
  %v789 = vsel %vm88, %v783, 0.0
  %v790 = vadd.f32 %v788, %v789
  %v791 = vsel %vm88, %v784, 0.0
  %v792 = vadd.f32 %v790, %v791
  %v793 = vsel %vm88, %v785, 0.0
  %v794 = vadd.f32 %v792, %v793
  %v795 = vsel %vm88, %v786, 0.0
  %v796 = vadd.f32 %v794, %v795
  %v797 = vsel %vm88, %v787, 0.0
  %v798 = vadd.f32 %v796, %v797
  %v799 = vrot.slane %v798, 4
  %v800 = vadd.f32 %v798, %v799
  %v801 = vrot.slane %v800, 2
  %v802 = vadd.f32 %v800, %v801
  %v803 = vrot.slane %v802, 1
  %v804 = vadd.f32 %v802, %v803
  %v805 = vmul.f32 %v804, 0.03125
  %v806 = vadd.f32 %v805, 1e-05
  %v807 = vrsqrt.pop %v806
  %v808 = vmul.f32 %v807, %v806
  %v809 = vmul.f32 %v808, %v807
  %v810 = vmul.f32 0.5, %v809
  %v811 = vsub.f32 1.5, %v810
  %v812 = vmul.f32 %v807, %v811
  %vm813 = vweird.f32 %v806
  %vm814 = vweird.f32 %v807
  %vm815 = vmor %vm813, %vm814
  %v816 = vsel %vm815, %v807, %v812
  %v817 = vmul.f32 %v770, %v816
  %v818 = vmul.f32 %v771, %v816
  %v819 = vmul.f32 %v772, %v816
  %v820 = vmul.f32 %v773, %v816
  %v821 = vmul.f32 %v774, %v816
  %v822 = vmul.f32 %v775, %v816
  %v824 = vperm.slane %v357, 0
  %v826 = vmul.f32 %v817, %v824
  %v827 = vmul.f32 %v818, %v824
  %v828 = vmul.f32 %v819, %v824
  %v829 = vmul.f32 %v820, %v824
  %v830 = vmul.f32 %v821, %v824
  %v831 = vmul.f32 %v822, %v824
  %v833 = vperm.slane %v358, 0
  %v835 = vadd.f32 %v826, %v833
  %v836 = vadd.f32 %v827, %v833
  %v837 = vadd.f32 %v828, %v833
  %v838 = vadd.f32 %v829, %v833
  %v839 = vadd.f32 %v830, %v833
  %v840 = vadd.f32 %v831, %v833
  %v841 = vmax.f32 %v835, 0.0
  %v842 = vmax.f32 %v836, 0.0
  %v843 = vmax.f32 %v837, 0.0
  %v844 = vmax.f32 %v838, 0.0
  %v845 = vmax.f32 %v839, 0.0
  %v846 = vmax.f32 %v840, 0.0
  %v847 = vmul.f32 %v841, %v719
  %v848 = vmul.f32 %v842, %v724
  %v849 = vmul.f32 %v843, %v729
  %v850 = vmul.f32 %v844, %v734
  %v851 = vmul.f32 %v845, %v739
  %v852 = vmul.f32 %v846, %v744
  %v859 = vrot.slane %v847, 4
  %v860 = vrot.slane %v848, 4
  %v861 = vsel %vm459, %v859, %v860
  %v862 = vrot.slane %v849, 4
  %v863 = vsel %vm459, %v860, %v862
  %v864 = vrot.slane %v850, 4
  %v865 = vsel %vm459, %v862, %v864
  %v866 = vrot.slane %v851, 4
  %v867 = vsel %vm459, %v864, %v866
  %v868 = vrot.slane %v852, 4
  %v869 = vsel %vm459, %v866, %v868
  %v877 = vsel %vm459, 0.0, %v859
  %v878 = vsel %vm459, %v868, 0.0
  %v879 = vld [vmem:[%s10] sm:$0xff]
  %v880 = vld [vmem:[%s10 + $0x8] sm:$0xff]
  %v881 = vld [vmem:[%s10 + $0x10] sm:$0xff]
  %v882 = vld [vmem:[%s10 + $0x18] sm:$0xff]
  %v883 = vld [vmem:[%s10 + $0x20] sm:$0xff]
  %v884 = vld [vmem:[%s10 + $0x28] sm:$0xff]
  %v885 = vld [vmem:[%s10 + $0x30] sm:$0xff]
  %v886 = vld [vmem:[%s10 + $0x38] sm:$0xff]
  %v887 = vld [vmem:[%s10 + $0x40] sm:$0xff]
  %v888 = vld [vmem:[%s11] sm:$0x1]
  %v889 = vld [vmem:[%s12] sm:$0x1]
  %v892 = vrot.slane %v877, 1
  %v893 = vrot.slane %v861, 1
  %v894 = vsel %vm67, %v892, %v893
  %v895 = vrot.slane %v863, 1
  %v896 = vsel %vm67, %v893, %v895
  %v897 = vrot.slane %v865, 1
  %v898 = vsel %vm67, %v895, %v897
  %v899 = vrot.slane %v867, 1
  %v900 = vsel %vm67, %v897, %v899
  %v901 = vrot.slane %v869, 1
  %v902 = vsel %vm67, %v899, %v901
  %v903 = vrot.slane %v878, 1
  %v904 = vsel %vm67, %v901, %v903
  %905 = vrot.lane.b32.xlu0 %v894, 8
  %v906 = vpop.permute.xlu0 %905
  %907 = vrot.lane.b32.xlu0 %v896, 8
  %v908 = vpop.permute.xlu0 %907
  %909 = vrot.lane.b32.xlu0 %v898, 8
  %v910 = vpop.permute.xlu0 %909
  %911 = vrot.lane.b32.xlu0 %v900, 8
  %v912 = vpop.permute.xlu0 %911
  %913 = vrot.lane.b32.xlu0 %v902, 8
  %v914 = vpop.permute.xlu0 %913
  %915 = vrot.lane.b32.xlu0 %v904, 8
  %v916 = vpop.permute.xlu0 %915
  %v923 = vrot.slane %v877, 2
  %v924 = vrot.slane %v861, 2
  %v925 = vsel %vm74, %v923, %v924
  %v926 = vrot.slane %v863, 2
  %v927 = vsel %vm74, %v924, %v926
  %v928 = vrot.slane %v865, 2
  %v929 = vsel %vm74, %v926, %v928
  %v930 = vrot.slane %v867, 2
  %v931 = vsel %vm74, %v928, %v930
  %v932 = vrot.slane %v869, 2
  %v933 = vsel %vm74, %v930, %v932
  %v934 = vrot.slane %v878, 2
  %v935 = vsel %vm74, %v932, %v934
  %936 = vrot.lane.b32.xlu0 %v925, 16
  %v937 = vpop.permute.xlu0 %936
  %938 = vrot.lane.b32.xlu0 %v927, 16
  %v939 = vpop.permute.xlu0 %938
  %940 = vrot.lane.b32.xlu0 %v929, 16
  %v941 = vpop.permute.xlu0 %940
  %942 = vrot.lane.b32.xlu0 %v931, 16
  %v943 = vpop.permute.xlu0 %942
  %944 = vrot.lane.b32.xlu0 %v933, 16
  %v945 = vpop.permute.xlu0 %944
  %946 = vrot.lane.b32.xlu0 %v935, 16
  %v947 = vpop.permute.xlu0 %946
  %v954 = vrot.slane %v877, 3
  %v955 = vrot.slane %v861, 3
  %v956 = vsel %vm81, %v954, %v955
  %v957 = vrot.slane %v863, 3
  %v958 = vsel %vm81, %v955, %v957
  %v959 = vrot.slane %v865, 3
  %v960 = vsel %vm81, %v957, %v959
  %v961 = vrot.slane %v867, 3
  %v962 = vsel %vm81, %v959, %v961
  %v963 = vrot.slane %v869, 3
  %v964 = vsel %vm81, %v961, %v963
  %v965 = vrot.slane %v878, 3
  %v966 = vsel %vm81, %v963, %v965
  %967 = vrot.lane.b32.xlu0 %v956, 24
  %v968 = vpop.permute.xlu0 %967
  %969 = vrot.lane.b32.xlu0 %v958, 24
  %v970 = vpop.permute.xlu0 %969
  %971 = vrot.lane.b32.xlu0 %v960, 24
  %v972 = vpop.permute.xlu0 %971
  %973 = vrot.lane.b32.xlu0 %v962, 24
  %v974 = vpop.permute.xlu0 %973
  %975 = vrot.lane.b32.xlu0 %v964, 24
  %v976 = vpop.permute.xlu0 %975
  %977 = vrot.lane.b32.xlu0 %v966, 24
  %v978 = vpop.permute.xlu0 %977
  %v985 = vrot.slane %v877, 4
  %v986 = vrot.slane %v861, 4
  %v987 = vsel %vm459, %v985, %v986
  %v988 = vrot.slane %v863, 4
  %v989 = vsel %vm459, %v986, %v988
  %v990 = vrot.slane %v865, 4
  %v991 = vsel %vm459, %v988, %v990
  %v992 = vrot.slane %v867, 4
  %v993 = vsel %vm459, %v990, %v992
  %v994 = vrot.slane %v869, 4
  %v995 = vsel %vm459, %v992, %v994
  %v996 = vrot.slane %v878, 4
  %v997 = vsel %vm459, %v994, %v996
  %998 = vrot.lane.b32.xlu0 %v987, 32
  %v999 = vpop.permute.xlu0 %998
  %1000 = vrot.lane.b32.xlu0 %v989, 32
  %v1001 = vpop.permute.xlu0 %1000
  %1002 = vrot.lane.b32.xlu0 %v991, 32
  %v1003 = vpop.permute.xlu0 %1002
  %1004 = vrot.lane.b32.xlu0 %v993, 32
  %v1005 = vpop.permute.xlu0 %1004
  %1006 = vrot.lane.b32.xlu0 %v995, 32
  %v1007 = vpop.permute.xlu0 %1006
  %1008 = vrot.lane.b32.xlu0 %v997, 32
  %v1009 = vpop.permute.xlu0 %1008
  %v1016 = vrot.slane %v877, 5
  %v1017 = vrot.slane %v861, 5
  %v1018 = vsel %vm491, %v1016, %v1017
  %v1019 = vrot.slane %v863, 5
  %v1020 = vsel %vm491, %v1017, %v1019
  %v1021 = vrot.slane %v865, 5
  %v1022 = vsel %vm491, %v1019, %v1021
  %v1023 = vrot.slane %v867, 5
  %v1024 = vsel %vm491, %v1021, %v1023
  %v1025 = vrot.slane %v869, 5
  %v1026 = vsel %vm491, %v1023, %v1025
  %v1027 = vrot.slane %v878, 5
  %v1028 = vsel %vm491, %v1025, %v1027
  %1029 = vrot.lane.b32.xlu0 %v1018, 40
  %v1030 = vpop.permute.xlu0 %1029
  %1031 = vrot.lane.b32.xlu0 %v1020, 40
  %v1032 = vpop.permute.xlu0 %1031
  %1033 = vrot.lane.b32.xlu0 %v1022, 40
  %v1034 = vpop.permute.xlu0 %1033
  %1035 = vrot.lane.b32.xlu0 %v1024, 40
  %v1036 = vpop.permute.xlu0 %1035
  %1037 = vrot.lane.b32.xlu0 %v1026, 40
  %v1038 = vpop.permute.xlu0 %1037
  %1039 = vrot.lane.b32.xlu0 %v1028, 40
  %v1040 = vpop.permute.xlu0 %1039
  %v1047 = vrot.slane %v877, 6
  %v1048 = vrot.slane %v861, 6
  %v1049 = vsel %vm523, %v1047, %v1048
  %v1050 = vrot.slane %v863, 6
  %v1051 = vsel %vm523, %v1048, %v1050
  %v1052 = vrot.slane %v865, 6
  %v1053 = vsel %vm523, %v1050, %v1052
  %v1054 = vrot.slane %v867, 6
  %v1055 = vsel %vm523, %v1052, %v1054
  %v1056 = vrot.slane %v869, 6
  %v1057 = vsel %vm523, %v1054, %v1056
  %v1058 = vrot.slane %v878, 6
  %v1059 = vsel %vm523, %v1056, %v1058
  %1060 = vrot.lane.b32.xlu0 %v1049, 48
  %v1061 = vpop.permute.xlu0 %1060
  %1062 = vrot.lane.b32.xlu0 %v1051, 48
  %v1063 = vpop.permute.xlu0 %1062
  %1064 = vrot.lane.b32.xlu0 %v1053, 48
  %v1065 = vpop.permute.xlu0 %1064
  %1066 = vrot.lane.b32.xlu0 %v1055, 48
  %v1067 = vpop.permute.xlu0 %1066
  %1068 = vrot.lane.b32.xlu0 %v1057, 48
  %v1069 = vpop.permute.xlu0 %1068
  %1070 = vrot.lane.b32.xlu0 %v1059, 48
  %v1071 = vpop.permute.xlu0 %1070
  %v1078 = vrot.slane %v877, 7
  %v1079 = vrot.slane %v861, 7
  %v1080 = vsel %vm555, %v1078, %v1079
  %v1081 = vrot.slane %v863, 7
  %v1082 = vsel %vm555, %v1079, %v1081
  %v1083 = vrot.slane %v865, 7
  %v1084 = vsel %vm555, %v1081, %v1083
  %v1085 = vrot.slane %v867, 7
  %v1086 = vsel %vm555, %v1083, %v1085
  %v1087 = vrot.slane %v869, 7
  %v1088 = vsel %vm555, %v1085, %v1087
  %v1089 = vrot.slane %v878, 7
  %v1090 = vsel %vm555, %v1087, %v1089
  %1091 = vrot.lane.b32.xlu0 %v1080, 56
  %v1092 = vpop.permute.xlu0 %1091
  %1093 = vrot.lane.b32.xlu0 %v1082, 56
  %v1094 = vpop.permute.xlu0 %1093
  %1095 = vrot.lane.b32.xlu0 %v1084, 56
  %v1096 = vpop.permute.xlu0 %1095
  %1097 = vrot.lane.b32.xlu0 %v1086, 56
  %v1098 = vpop.permute.xlu0 %1097
  %1099 = vrot.lane.b32.xlu0 %v1088, 56
  %v1100 = vpop.permute.xlu0 %1099
  %1101 = vrot.lane.b32.xlu0 %v1090, 56
  %v1102 = vpop.permute.xlu0 %1101
  %1109 = vrot.lane.b32.xlu0 %v861, 64
  %v1110 = vpop.permute.xlu0 %1109
  %1111 = vrot.lane.b32.xlu0 %v863, 64
  %v1112 = vpop.permute.xlu0 %1111
  %1113 = vrot.lane.b32.xlu0 %v865, 64
  %v1114 = vpop.permute.xlu0 %1113
  %1115 = vrot.lane.b32.xlu0 %v867, 64
  %v1116 = vpop.permute.xlu0 %1115
  %1117 = vrot.lane.b32.xlu0 %v869, 64
  %v1118 = vpop.permute.xlu0 %1117
  %1119 = vrot.lane.b32.xlu0 %v878, 64
  %v1120 = vpop.permute.xlu0 %1119
  %v1127 = vsel %vm88, %v877, %v906
  %v1128 = vsel %vm88, %v861, %v908
  %v1129 = vsel %vm88, %v863, %v910
  %v1130 = vsel %vm88, %v865, %v912
  %v1131 = vsel %vm88, %v867, %v914
  %v1132 = vsel %vm88, %v869, %v916
  %v1133 = vsel %vm44, %v1127, %v937
  %v1134 = vsel %vm44, %v1128, %v939
  %v1135 = vsel %vm44, %v1129, %v941
  %v1136 = vsel %vm44, %v1130, %v943
  %v1137 = vsel %vm44, %v1131, %v945
  %v1138 = vsel %vm44, %v1132, %v947
  %v1139 = vsel %vm91, %v1133, %v968
  %v1140 = vsel %vm91, %v1134, %v970
  %v1141 = vsel %vm91, %v1135, %v972
  %v1142 = vsel %vm91, %v1136, %v974
  %v1143 = vsel %vm91, %v1137, %v976
  %v1144 = vsel %vm91, %v1138, %v978
  %v1145 = vsel %vm108, %v1139, %v999
  %v1146 = vsel %vm108, %v1140, %v1001
  %v1147 = vsel %vm108, %v1141, %v1003
  %v1148 = vsel %vm108, %v1142, %v1005
  %v1149 = vsel %vm108, %v1143, %v1007
  %v1150 = vsel %vm108, %v1144, %v1009
  %vm1151 = vcmask 326656
  %v1152 = vsel %vm1151, %v1145, %v1030
  %v1153 = vsel %vm1151, %v1146, %v1032
  %v1154 = vsel %vm1151, %v1147, %v1034
  %v1155 = vsel %vm1151, %v1148, %v1036
  %v1156 = vsel %vm1151, %v1149, %v1038
  %v1157 = vsel %vm1151, %v1150, %v1040
  %v1158 = vsel %vm599, %v1152, %v1061
  %v1159 = vsel %vm599, %v1153, %v1063
  %v1160 = vsel %vm599, %v1154, %v1065
  %v1161 = vsel %vm599, %v1155, %v1067
  %v1162 = vsel %vm599, %v1156, %v1069
  %v1163 = vsel %vm599, %v1157, %v1071
  %vm1164 = vcmask 457728
  %v1165 = vsel %vm1164, %v1158, %v1092
  %v1166 = vsel %vm1164, %v1159, %v1094
  %v1167 = vsel %vm1164, %v1160, %v1096
  %v1168 = vsel %vm1164, %v1161, %v1098
  %v1169 = vsel %vm1164, %v1162, %v1100
  %v1170 = vsel %vm1164, %v1163, %v1102
  %v1171 = vsel %vm606, %v1165, %v1110
  %v1172 = vsel %vm606, %v1166, %v1112
  %v1173 = vsel %vm606, %v1167, %v1114
  %v1174 = vsel %vm606, %v1168, %v1116
  %v1175 = vsel %vm606, %v1169, %v1118
  %v1176 = vsel %vm606, %v1170, %v1120
  %vm1177 = vcmask 588800
  %v1179 = vsel %vm1177, %v1171, 0
  %v1182 = vsel %vm1177, %v1172, 0
  %v1185 = vsel %vm1177, %v1173, 0
  %v1188 = vsel %vm1177, %v1174, 0
  %v1191 = vsel %vm1177, %v1175, 0
  %v1194 = vsel %vm1177, %v1176, 0
  %1196 = vmatpush.msra.mxu0 0.0
  %1197 = vmatpush.msra.mxu0 0.0
  %1198 = vmatpush.msra.mxu0 0.0
  %1199 = vmatpush.msra.mxu0 0.0
  %1200 = vmatpush.msra.mxu0 0.0
  %1201 = vmatpush.msra.mxu0 0.0
  %1202 = vmatpush.msra.mxu0 0.0
  %1203 = vmatpush.msra.mxu0 %v887
  %1204 = vmatpush.msra.mxu0 %v886
  %1205 = vmatpush.msra.mxu0 %v885
  %1206 = vmatpush.msra.mxu0 %v884
  %1207 = vmatpush.msra.mxu0 %v883
  %1208 = vmatpush.msra.mxu0 %v882
  %1209 = vmatpush.msra.mxu0 %v881
  %1210 = vmatpush.msra.mxu0 %v880
  %1211 = vmatpush.msra.mxu0 %v879
  %1212 = vmatmul.f32.gmra.mxu0 %v1179
  %v1213 = vpop.f32.mrf.mxu0
  %v1214 = vadd.f32 0.0, %v1213
  %1215 = vmatmul.f32.gmra.mxu0 %v1182
  %v1216 = vpop.f32.mrf.mxu0
  %v1217 = vadd.f32 0.0, %v1216
  %1218 = vmatmul.f32.gmra.mxu0 %v1185
  %v1219 = vpop.f32.mrf.mxu0
  %v1220 = vadd.f32 0.0, %v1219
  %1221 = vmatmul.f32.gmra.mxu0 %v1188
  %v1222 = vpop.f32.mrf.mxu0
  %v1223 = vadd.f32 0.0, %v1222
  %1224 = vmatmul.f32.gmra.mxu0 %v1191
  %v1225 = vpop.f32.mrf.mxu0
  %v1226 = vadd.f32 0.0, %v1225
  %1227 = vmatmul.f32.gmra.mxu0 %v1194
  %v1228 = vpop.f32.mrf.mxu0
  %v1229 = vadd.f32 0.0, %v1228
  %1230 = vdwg.mxu0
  %v1231 = vmul.f32 %v1214, %v719
  %v1232 = vmul.f32 %v1217, %v724
  %v1233 = vmul.f32 %v1220, %v729
  %v1234 = vmul.f32 %v1223, %v734
  %v1235 = vmul.f32 %v1226, %v739
  %v1236 = vmul.f32 %v1229, %v744
  %v1237 = vsel %vm88, %v1231, 0.0
  %v1238 = vsel %vm88, %v1232, 0.0
  %v1239 = vadd.f32 %v1237, %v1238
  %v1240 = vsel %vm88, %v1233, 0.0
  %v1241 = vadd.f32 %v1239, %v1240
  %v1242 = vsel %vm88, %v1234, 0.0
  %v1243 = vadd.f32 %v1241, %v1242
  %v1244 = vsel %vm88, %v1235, 0.0
  %v1245 = vadd.f32 %v1243, %v1244
  %v1246 = vsel %vm88, %v1236, 0.0
  %v1247 = vadd.f32 %v1245, %v1246
  %v1248 = vrot.slane %v1247, 4
  %v1249 = vadd.f32 %v1247, %v1248
  %v1250 = vrot.slane %v1249, 2
  %v1251 = vadd.f32 %v1249, %v1250
  %v1252 = vrot.slane %v1251, 1
  %v1253 = vadd.f32 %v1251, %v1252
  %v1254 = vmul.f32 %v1253, 0.03125
  %v1255 = vsub.f32 %v1214, %v1254
  %v1256 = vsub.f32 %v1217, %v1254
  %v1257 = vsub.f32 %v1220, %v1254
  %v1258 = vsub.f32 %v1223, %v1254
  %v1259 = vsub.f32 %v1226, %v1254
  %v1260 = vsub.f32 %v1229, %v1254
  %v1261 = vmul.f32 %v1255, %v1255
  %v1262 = vmul.f32 %v1256, %v1256
  %v1263 = vmul.f32 %v1257, %v1257
  %v1264 = vmul.f32 %v1258, %v1258
  %v1265 = vmul.f32 %v1259, %v1259
  %v1266 = vmul.f32 %v1260, %v1260
  %v1267 = vmul.f32 %v719, %v1261
  %v1268 = vmul.f32 %v724, %v1262
  %v1269 = vmul.f32 %v729, %v1263
  %v1270 = vmul.f32 %v734, %v1264
  %v1271 = vmul.f32 %v739, %v1265
  %v1272 = vmul.f32 %v744, %v1266
  %v1273 = vsel %vm88, %v1267, 0.0
  %v1274 = vsel %vm88, %v1268, 0.0
  %v1275 = vadd.f32 %v1273, %v1274
  %v1276 = vsel %vm88, %v1269, 0.0
  %v1277 = vadd.f32 %v1275, %v1276
  %v1278 = vsel %vm88, %v1270, 0.0
  %v1279 = vadd.f32 %v1277, %v1278
  %v1280 = vsel %vm88, %v1271, 0.0
  %v1281 = vadd.f32 %v1279, %v1280
  %v1282 = vsel %vm88, %v1272, 0.0
  %v1283 = vadd.f32 %v1281, %v1282
  %v1284 = vrot.slane %v1283, 4
  %v1285 = vadd.f32 %v1283, %v1284
  %v1286 = vrot.slane %v1285, 2
  %v1287 = vadd.f32 %v1285, %v1286
  %v1288 = vrot.slane %v1287, 1
  %v1289 = vadd.f32 %v1287, %v1288
  %v1290 = vmul.f32 %v1289, 0.03125
  %v1291 = vadd.f32 %v1290, 1e-05
  %v1292 = vrsqrt.pop %v1291
  %v1293 = vmul.f32 %v1292, %v1291
  %v1294 = vmul.f32 %v1293, %v1292
  %v1295 = vmul.f32 0.5, %v1294
  %v1296 = vsub.f32 1.5, %v1295
  %v1297 = vmul.f32 %v1292, %v1296
  %vm1298 = vweird.f32 %v1291
  %vm1299 = vweird.f32 %v1292
  %vm1300 = vmor %vm1298, %vm1299
  %v1301 = vsel %vm1300, %v1292, %v1297
  %v1302 = vmul.f32 %v1255, %v1301
  %v1303 = vmul.f32 %v1256, %v1301
  %v1304 = vmul.f32 %v1257, %v1301
  %v1305 = vmul.f32 %v1258, %v1301
  %v1306 = vmul.f32 %v1259, %v1301
  %v1307 = vmul.f32 %v1260, %v1301
  %v1309 = vperm.slane %v888, 0
  %v1311 = vmul.f32 %v1302, %v1309
  %v1312 = vmul.f32 %v1303, %v1309
  %v1313 = vmul.f32 %v1304, %v1309
  %v1314 = vmul.f32 %v1305, %v1309
  %v1315 = vmul.f32 %v1306, %v1309
  %v1316 = vmul.f32 %v1307, %v1309
  %v1318 = vperm.slane %v889, 0
  %v1320 = vadd.f32 %v1311, %v1318
  %v1321 = vadd.f32 %v1312, %v1318
  %v1322 = vadd.f32 %v1313, %v1318
  %v1323 = vadd.f32 %v1314, %v1318
  %v1324 = vadd.f32 %v1315, %v1318
  %v1325 = vadd.f32 %v1316, %v1318
  %v1326 = vmax.f32 %v1320, 0.0
  %v1327 = vmax.f32 %v1321, 0.0
  %v1328 = vmax.f32 %v1322, 0.0
  %v1329 = vmax.f32 %v1323, 0.0
  %v1330 = vmax.f32 %v1324, 0.0
  %v1331 = vmax.f32 %v1325, 0.0
  %v1332 = vmul.f32 %v1326, %v719
  %v1333 = vmul.f32 %v1327, %v724
  %v1334 = vmul.f32 %v1328, %v729
  %v1335 = vmul.f32 %v1329, %v734
  %v1336 = vmul.f32 %v1330, %v739
  %v1337 = vmul.f32 %v1331, %v744
  %vm1338 = vcmask 64516
  %1339 = vst.msk [vmem:[%s13 - $0x4] sm:$0xf0] %vm1338, %v1332
  %1340 = vst.msk [vmem:[%s13 + $0x4] sm:$0xff] %vm88, %v1333
  %vm1341 = vcmask 60416
  %1342 = vst.msk [vmem:[%s13 + $0xc] sm:$0xf] %vm1341, %v1334
  %s1343 = scalar_lea.vmem %s13, 16
  %1344 = vst.msk [vmem:[%s1343 - $0x4] sm:$0xf0] %vm1338, %v1335
  %1345 = vst.msk [vmem:[%s1343 + $0x4] sm:$0xff] %vm88, %v1336
  %1346 = vst.msk [vmem:[%s1343 + $0xc] sm:$0xf] %vm1341, %v1337
  // Predicated region
  $region54: #{unet_up_forward.1} parent=0 // pred_check
    _
  $region55: #{unet_up_forward.1} parent=0 // pred_check_branch
    %1348 = sbr.rel (0) target = $region57
  $region56: #{unet_up_forward.1} parent=0 // pred_region
    _
  $region57: #{unet_up_forward.1} parent=0 // pred_fallthru
    _
  // Predicated region
  $region58: #{unet_up_forward.1} parent=0 // pred_check
    _
  $region59: #{unet_up_forward.1} parent=0 // pred_check_branch
    %1350 = sbr.rel (0) target = $region61
  $region60: #{unet_up_forward.1} parent=0 // pred_region
    _
  $region61: #{unet_up_forward.1} parent=0 // pred_fallthru
    _

</llo_original>
